<compile_context>
chip_gen: v7x
topology: tpu7x:2x2x1
jax: 0.10.0
libtpu: 0.0.40
codegen_flags: <defaults>
</compile_context>

<pallas_src>
import functools

import jax
import jax.numpy as jnp
from jax.experimental import pallas as pl
from jax.experimental.pallas import tpu as pltpu

BN_EPS = 1e-5


# ---------------------------------------------------------------------------
# Fused Pallas kernel: the whole ResidualLayer for a stack of images
# ---------------------------------------------------------------------------
def _residual_layer_kernel(x_ref, wb_ref, b_ref, out_ref, *, H, M, WC):
    """x_ref  : (M, WC)       f32  lane-dense activations, M = images_per_step*H
       wb_ref : (4, 3*WC, WC)      stacked band weights (K bands: h-1 | h | h+1),
                                   BN scale folded, bf16 (perf) or f32 (exact)
       b_ref  : (4, 1, WC)    f32  folded BN bias, tiled across W
       out_ref: (M, WC)       f32
    """
    mm_dtype = wb_ref.dtype

    # Row index *within its image* for every row of the batch-stacked slab.
    row = jax.lax.broadcasted_iota(jnp.int32, (M, WC), 0) % H
    has_prev = row > 0          # row h-1 exists inside the same image
    has_next = row < (H - 1)    # row h+1 exists inside the same image

    b_all = b_ref[...]          # (4, 1, WC) biases hoisted into vregs once

    def conv_bn(a, idx):
        # 3x3 SAME conv + folded BN as ONE matmul with K = 3*WC.
        #   stage[h] = [ a[h-1] | a[h] | a[h+1] ]   (per-image halo rows are 0)
        # Row shifts via pltpu.roll (XLU) + select; kx taps, W-direction zero
        # padding, channel mixing and the BN scale are baked into wb.
        prev = jnp.where(has_prev, pltpu.roll(a, 1, axis=0), 0.0)
        nxt = jnp.where(has_next, pltpu.roll(a, M - 1, axis=0), 0.0)
        stage = jnp.concatenate([prev, a, nxt], axis=-1).astype(mm_dtype)
        y = jnp.dot(stage, wb_ref[idx], preferred_element_type=jnp.float32)
        return y + b_all[idx]                    # (1, WC) bias broadcasts over rows

    x0 = x_ref[...]
    h1 = jnp.maximum(conv_bn(x0, 0), 0.0)        # block1.conv_1 + BN + ReLU
    x1 = jnp.maximum(x0 + conv_bn(h1, 1), 0.0)   # block1.conv_2 + BN + res + ReLU
    h2 = jnp.maximum(conv_bn(x1, 2), 0.0)        # block2.conv_1 + BN + ReLU
    x2 = jnp.maximum(x1 + conv_bn(h2, 3), 0.0)   # block2.conv_2 + BN + res + ReLU
    out_ref[...] = x2.astype(out_ref.dtype)


# ---------------------------------------------------------------------------
# Band-weight construction (wrapper-side, traced once under jit)
# ---------------------------------------------------------------------------
def _build_band_weight(w, scale, W):
    """w: (3,3,Cin,Cout) HWIO conv weight, scale: (Cout,) folded BN scale.

    Returns (3, W*Cin, W*Cout): for kernel row ky,
      Wb[ky, xi*Cin+ci, xo*Cout+co] = w[ky, xi-xo+1, ci, co] * scale[co]
    (zero where the kx tap falls outside [0,3) -> W-direction SAME padding is
    baked into the matrix).
    """
    kh, kw, cin, cout = w.shape
    ws = w * scale[None, None, None, :]            # fold BN scale per out-channel
    rows = jnp.arange(W * cin)
    cols = jnp.arange(W * cout)
    xi, ci = rows // cin, rows % cin               # input spatial pos / channel
    xo, co = cols // cout, cols % cout             # output spatial pos / channel
    kx = xi[:, None] - xo[None, :] + 1             # tap index implied by (xi, xo)
    valid = (kx >= 0) & (kx < kw)
    kxc = jnp.clip(kx, 0, kw - 1)
    wb = ws[:, kxc, ci[:, None], co[None, :]]      # (kh, W*Cin, W*Cout)
    return jnp.where(valid[None], wb, 0.0)


# ---------------------------------------------------------------------------
# pallas_call wrapper
# ---------------------------------------------------------------------------
def residual_layer_forward(x_nhwc, params, *, compute_dtype=jnp.bfloat16,
                           images_per_step=None):
    """x_nhwc: (N, H, W, C) f32.

    compute_dtype  : matmul input dtype (bf16 perf path / f32 exact path).
    images_per_step: images stacked along M per grid step.  Default = N (one
                     grid step; best on single-TC v5e/v6e).  Use N//2 on v7x
                     so each of the two TensorCores takes half the batch.
    """
    N, H, W, C = x_nhwc.shape
    WC = W * C
    B = N if images_per_step is None else images_per_step
    assert N % B == 0, (N, B)
    M = B * H

    p1, p2 = params["block1"], params["block2"]
    # (4, 3, WC, WC) -> (4, 3*WC, WC); K bands ordered [row h-1 | row h | row h+1].
    wb = jnp.stack([
        _build_band_weight(p1["w1"], p1["scale1"], W),
        _build_band_weight(p1["w2"], p1["scale2"], W),
        _build_band_weight(p2["w1"], p2["scale1"], W),
        _build_band_weight(p2["w2"], p2["scale2"], W),
    ]).reshape(4, 3 * WC, WC).astype(compute_dtype)
    bias = jnp.stack([
        jnp.tile(p1["bias1"], W), jnp.tile(p1["bias2"], W),
        jnp.tile(p2["bias1"], W), jnp.tile(p2["bias2"], W),
    ]).reshape(4, 1, WC).astype(jnp.float32)

    x2d = x_nhwc.reshape(N * H, WC)            # lane-dense, batch stacked along M

    kernel = functools.partial(_residual_layer_kernel, H=H, M=M, WC=WC)
    out = pl.pallas_call(
        kernel,
        out_shape=jax.ShapeDtypeStruct((N * H, WC), jnp.float32),
        grid=(N // B,),
        in_specs=[
            pl.BlockSpec((M, WC), lambda n: (n, 0)),
            pl.BlockSpec((4, 3 * WC, WC), lambda n: (0, 0, 0)),   # resident weights
            pl.BlockSpec((4, 1, WC), lambda n: (0, 0, 0)),
        ],
        out_specs=pl.BlockSpec((M, WC), lambda n: (n, 0)),
        compiler_params=pltpu.CompilerParams(
            dimension_semantics=("parallel",),    # batch split across TCs on v7x
            vmem_limit_bytes=32 * 1024 * 1024,
        ),
    )(x2d, wb, bias)
    return out.reshape(N, H, W, C)


# ---------------------------------------------------------------------------
# Deterministic parameter construction (synthetic, no checkpoint)
# ---------------------------------------------------------------------------
def _fold_bn(gamma, beta, mean, var, conv_bias):
    scale = gamma / jnp.sqrt(var + BN_EPS)
    bias = beta + (conv_bias - mean) * scale
    return scale, bias


def init_residual_block_params(key, channels):
    k = jax.random.split(key, 12)
    fan_in = channels * 9

    def conv_params(kw, kb):
        w = jax.random.normal(kw, (3, 3, channels, channels), jnp.float32)
        w = w / jnp.sqrt(jnp.float32(fan_in))
        cb = 0.05 * jax.random.normal(kb, (channels,), jnp.float32)
        return w, cb

    def bn_params(kg, kb, km, kv):
        g = jax.random.uniform(kg, (channels,), jnp.float32, 0.5, 1.5)
        b = 0.1 * jax.random.normal(kb, (channels,), jnp.float32)
        m = 0.1 * jax.random.normal(km, (channels,), jnp.float32)
        v = jax.random.uniform(kv, (channels,), jnp.float32, 0.5, 1.5)
        return g, b, m, v

    w1, cb1 = conv_params(k[0], k[1])
    w2, cb2 = conv_params(k[2], k[3])
    scale1, bias1 = _fold_bn(*bn_params(k[4], k[5], k[6], k[7]), cb1)
    scale2, bias2 = _fold_bn(*bn_params(k[8], k[9], k[10], k[11]), cb2)
    return dict(w1=w1, scale1=scale1, bias1=bias1,
                w2=w2, scale2=scale2, bias2=bias2)


# ---------------------------------------------------------------------------
# Pure-JAX reference (for correctness check only)
# ---------------------------------------------------------------------------
def _residual_block_ref(x, p):
    def cbn(z, w, s, b):
        y = jax.lax.conv_general_dilated(
            z, w, window_strides=(1, 1), padding="SAME",
            dimension_numbers=("NHWC", "HWIO", "NHWC"))
        return y * s + b

    h = jnp.maximum(cbn(x, p["w1"], p["scale1"], p["bias1"]), 0.0)
    return jnp.maximum(x + cbn(h, p["w2"], p["scale2"], p["bias2"]), 0.0)


def _residual_layer_ref(x, params):
    return _residual_block_ref(_residual_block_ref(x, params["block1"]),
                               params["block2"])


if __name__ == "__main__":
    key = jax.random.PRNGKey(0)
    kx, kb1, kb2 = jax.random.split(key, 3)

    N, H, W, C = 2, 16, 16, 8   # NHWC (== NCHW [2, 8, 16, 16] in PyTorch terms)
    x = jax.random.normal(kx, (N, H, W, C), jnp.float32)
    params = {"block1": init_residual_block_params(kb1, C),
              "block2": init_residual_block_params(kb2, C)}

    ref = _residual_layer_ref(x, params)

    # Exact path: f32 matmul inputs, single grid step (v5e/v6e configuration).
    out_f32 = jax.block_until_ready(
        jax.jit(functools.partial(residual_layer_forward,
                                  compute_dtype=jnp.float32))(x, params))
    assert out_f32.shape == (N, H, W, C), out_f32.shape
    err_f32 = float(jnp.max(jnp.abs(out_f32 - ref)))
    assert jnp.allclose(out_f32, ref, atol=1e-3, rtol=1e-3), err_f32

    # Exact path, one image per grid step (v7x 2-TensorCore configuration).
    out_split = jax.block_until_ready(
        jax.jit(functools.partial(residual_layer_forward,
                                  compute_dtype=jnp.float32,
                                  images_per_step=1))(x, params))
    err_split = float(jnp.max(jnp.abs(out_split - ref)))
    assert jnp.allclose(out_split, ref, atol=1e-3, rtol=1e-3), err_split

    # Perf path (default): bf16 matmul inputs, f32 accumulation + f32 epilogue.
    # Activations are re-cast to bf16 before each of the 4 chained convs, so
    # this path drifts from the f32 reference (hence the loose tolerance); it
    # is NOT bit-matching.
    out_bf16 = jax.block_until_ready(
        jax.jit(functools.partial(residual_layer_forward,
                                  compute_dtype=jnp.bfloat16))(x, params))
    err_bf16 = float(jnp.max(jnp.abs(out_bf16 - ref)))
    assert jnp.allclose(out_bf16, ref, atol=2.5e-1, rtol=1e-1), err_bf16

    print("KERNEL_OK")
</pallas_src>

<mosaic_0001>
module attributes {stable_mosaic.version = 11 : i64} {
  func.func @_residual_layer_kernel(%arg0: i32, %arg1: memref<32x128xf32, #tpu.memory_space<vmem>>, %arg2: memref<4x384x128xf32, #tpu.memory_space<vmem>>, %arg3: memref<4x1x128xf32, #tpu.memory_space<vmem>>, %arg4: memref<32x128xf32, #tpu.memory_space<vmem>>) attributes {dimension_semantics = [#tpu.dimension_semantics<parallel>], iteration_bounds = array<i64: 1>, scalar_prefetch = 0 : i64, scratch_operands = 0 : i64, tpu.core_type = #tpu.core_type<tc>, window_params = [{transform_indices = @transform_0, window_bounds = array<i64: 32, 128>}, {pipeline_mode = #tpu.pipeline_mode<synchronous>, transform_indices = @transform_1, window_bounds = array<i64: 4, 384, 128>}, {pipeline_mode = #tpu.pipeline_mode<synchronous>, transform_indices = @transform_2, window_bounds = array<i64: 4, 1, 128>}, {transform_indices = @transform_3, window_bounds = array<i64: 32, 128>}]} {
    %0 = tpu.iota {dimensions = array<i32: 0>} : vector<32x128xi32>
    %c16_i32 = arith.constant 16 : i32
    %c0_i32 = arith.constant 0 : i32
    %1 = arith.cmpi eq, %c16_i32, %c0_i32 : i32
    %c1_i32 = arith.constant 1 : i32
    %2 = arith.select %1, %c1_i32, %c16_i32 : i32
    %3 = vector.broadcast %2 : i32 to vector<32x128xi32>
    %4 = arith.remsi %0, %3 : vector<32x128xi32>
    %c0_i32_0 = arith.constant 0 : i32
    %5 = vector.broadcast %c0_i32_0 : i32 to vector<32x128xi32>
    %6 = arith.cmpi ne, %4, %5 : vector<32x128xi32>
    %c0_i32_1 = arith.constant 0 : i32
    %7 = vector.broadcast %c0_i32_1 : i32 to vector<32x128xi32>
    %8 = arith.cmpi slt, %4, %7 : vector<32x128xi32>
    %c0_i32_2 = arith.constant 0 : i32
    %9 = arith.cmpi slt, %2, %c0_i32_2 : i32
    %10 = vector.broadcast %9 : i1 to vector<32x128xi1>
    %11 = vector.broadcast %10 : vector<32x128xi1> to vector<32x128xi1>
    %12 = arith.xori %8, %11 : vector<32x128xi1>
    %13 = arith.andi %12, %6 : vector<32x128xi1>
    %14 = vector.broadcast %2 : i32 to vector<32x128xi32>
    %15 = arith.addi %4, %14 : vector<32x128xi32>
    %16 = arith.select %13, %15, %4 : vector<32x128xi1>, vector<32x128xi32>
    %c0_i32_3 = arith.constant 0 : i32
    %17 = vector.broadcast %c0_i32_3 : i32 to vector<32x128xi32>
    %18 = arith.cmpi sgt, %16, %17 : vector<32x128xi32>
    %c15_i32 = arith.constant 15 : i32
    %19 = vector.broadcast %c15_i32 : i32 to vector<32x128xi32>
    %20 = arith.cmpi slt, %16, %19 : vector<32x128xi32>
    %c0 = arith.constant 0 : index
    %c0_4 = arith.constant 0 : index
    %c0_5 = arith.constant 0 : index
    %21 = vector.load %arg3[%c0, %c0_4, %c0_5] : memref<4x1x128xf32, #tpu.memory_space<vmem>>, vector<4x1x128xf32>
    %c0_6 = arith.constant 0 : index
    %c0_7 = arith.constant 0 : index
    %22 = vector.load %arg1[%c0_6, %c0_7] : memref<32x128xf32, #tpu.memory_space<vmem>>, vector<32x128xf32>
    %c1_i32_8 = arith.constant 1 : i32
    %23 = tpu.dynamic_rotate %22 by %c1_i32_8 dim 0 : vector<32x128xf32>, i32 -> vector<32x128xf32>
    %cst = arith.constant 0.000000e+00 : f32
    %24 = vector.broadcast %cst : f32 to vector<32x128xf32>
    %25 = arith.select %18, %23, %24 : vector<32x128xi1>, vector<32x128xf32>
    %c31_i32 = arith.constant 31 : i32
    %26 = tpu.dynamic_rotate %22 by %c31_i32 dim 0 : vector<32x128xf32>, i32 -> vector<32x128xf32>
    %cst_9 = arith.constant 0.000000e+00 : f32
    %27 = vector.broadcast %cst_9 : f32 to vector<32x128xf32>
    %28 = arith.select %20, %26, %27 : vector<32x128xi1>, vector<32x128xf32>
    %29 = tpu.concatenate %25, %22, %28 in 1 : vector<32x128xf32>, vector<32x128xf32>, vector<32x128xf32> -> vector<32x384xf32>
    %c0_10 = arith.constant 0 : index
    %c0_11 = arith.constant 0 : index
    %c0_12 = arith.constant 0 : index
    %30 = vector.load %arg2[%c0_10, %c0_11, %c0_12] : memref<4x384x128xf32, #tpu.memory_space<vmem>>, vector<1x384x128xf32>
    %31 = vector.shape_cast %30 : vector<1x384x128xf32> to vector<384x128xf32>
    %cst_13 = arith.constant dense<0.000000e+00> : vector<32x128xf32>
    %32 = tpu.matmul %29, %31, %cst_13 {dimension_numbers = #tpu.dot_dimension_numbers<[1], [0], [0], [1], [0, 0, 1, 1], [], []>} : vector<32x384xf32>, vector<384x128xf32>, vector<32x128xf32> -> vector<32x128xf32>
    %33 = vector.extract_strided_slice %21 {offsets = [0, 0, 0], sizes = [1, 1, 128], strides = [1, 1, 1]} : vector<4x1x128xf32> to vector<1x1x128xf32>
    %34 = vector.shape_cast %33 : vector<1x1x128xf32> to vector<1x128xf32>
    %35 = vector.broadcast %34 : vector<1x128xf32> to vector<32x128xf32>
    %36 = arith.addf %32, %35 : vector<32x128xf32>
    %cst_14 = arith.constant 0.000000e+00 : f32
    %37 = vector.broadcast %cst_14 : f32 to vector<32x128xf32>
    %38 = arith.maximumf %36, %37 : vector<32x128xf32>
    %c1_i32_15 = arith.constant 1 : i32
    %39 = tpu.dynamic_rotate %38 by %c1_i32_15 dim 0 : vector<32x128xf32>, i32 -> vector<32x128xf32>
    %cst_16 = arith.constant 0.000000e+00 : f32
    %40 = vector.broadcast %cst_16 : f32 to vector<32x128xf32>
    %41 = arith.select %18, %39, %40 : vector<32x128xi1>, vector<32x128xf32>
    %c31_i32_17 = arith.constant 31 : i32
    %42 = tpu.dynamic_rotate %38 by %c31_i32_17 dim 0 : vector<32x128xf32>, i32 -> vector<32x128xf32>
    %cst_18 = arith.constant 0.000000e+00 : f32
    %43 = vector.broadcast %cst_18 : f32 to vector<32x128xf32>
    %44 = arith.select %20, %42, %43 : vector<32x128xi1>, vector<32x128xf32>
    %45 = tpu.concatenate %41, %38, %44 in 1 : vector<32x128xf32>, vector<32x128xf32>, vector<32x128xf32> -> vector<32x384xf32>
    %c1 = arith.constant 1 : index
    %c0_19 = arith.constant 0 : index
    %c0_20 = arith.constant 0 : index
    %46 = vector.load %arg2[%c1, %c0_19, %c0_20] : memref<4x384x128xf32, #tpu.memory_space<vmem>>, vector<1x384x128xf32>
    %47 = vector.shape_cast %46 : vector<1x384x128xf32> to vector<384x128xf32>
    %cst_21 = arith.constant dense<0.000000e+00> : vector<32x128xf32>
    %48 = tpu.matmul %45, %47, %cst_21 {dimension_numbers = #tpu.dot_dimension_numbers<[1], [0], [0], [1], [0, 0, 1, 1], [], []>} : vector<32x384xf32>, vector<384x128xf32>, vector<32x128xf32> -> vector<32x128xf32>
    %49 = vector.extract_strided_slice %21 {offsets = [1, 0, 0], sizes = [1, 1, 128], strides = [1, 1, 1]} : vector<4x1x128xf32> to vector<1x1x128xf32>
    %50 = vector.shape_cast %49 : vector<1x1x128xf32> to vector<1x128xf32>
    %51 = vector.broadcast %50 : vector<1x128xf32> to vector<32x128xf32>
    %52 = arith.addf %48, %51 : vector<32x128xf32>
    %53 = arith.addf %22, %52 : vector<32x128xf32>
    %cst_22 = arith.constant 0.000000e+00 : f32
    %54 = vector.broadcast %cst_22 : f32 to vector<32x128xf32>
    %55 = arith.maximumf %53, %54 : vector<32x128xf32>
    %c1_i32_23 = arith.constant 1 : i32
    %56 = tpu.dynamic_rotate %55 by %c1_i32_23 dim 0 : vector<32x128xf32>, i32 -> vector<32x128xf32>
    %cst_24 = arith.constant 0.000000e+00 : f32
    %57 = vector.broadcast %cst_24 : f32 to vector<32x128xf32>
    %58 = arith.select %18, %56, %57 : vector<32x128xi1>, vector<32x128xf32>
    %c31_i32_25 = arith.constant 31 : i32
    %59 = tpu.dynamic_rotate %55 by %c31_i32_25 dim 0 : vector<32x128xf32>, i32 -> vector<32x128xf32>
    %cst_26 = arith.constant 0.000000e+00 : f32
    %60 = vector.broadcast %cst_26 : f32 to vector<32x128xf32>
    %61 = arith.select %20, %59, %60 : vector<32x128xi1>, vector<32x128xf32>
    %62 = tpu.concatenate %58, %55, %61 in 1 : vector<32x128xf32>, vector<32x128xf32>, vector<32x128xf32> -> vector<32x384xf32>
    %c2 = arith.constant 2 : index
    %c0_27 = arith.constant 0 : index
    %c0_28 = arith.constant 0 : index
    %63 = vector.load %arg2[%c2, %c0_27, %c0_28] : memref<4x384x128xf32, #tpu.memory_space<vmem>>, vector<1x384x128xf32>
    %64 = vector.shape_cast %63 : vector<1x384x128xf32> to vector<384x128xf32>
    %cst_29 = arith.constant dense<0.000000e+00> : vector<32x128xf32>
    %65 = tpu.matmul %62, %64, %cst_29 {dimension_numbers = #tpu.dot_dimension_numbers<[1], [0], [0], [1], [0, 0, 1, 1], [], []>} : vector<32x384xf32>, vector<384x128xf32>, vector<32x128xf32> -> vector<32x128xf32>
    %66 = vector.extract_strided_slice %21 {offsets = [2, 0, 0], sizes = [1, 1, 128], strides = [1, 1, 1]} : vector<4x1x128xf32> to vector<1x1x128xf32>
    %67 = vector.shape_cast %66 : vector<1x1x128xf32> to vector<1x128xf32>
    %68 = vector.broadcast %67 : vector<1x128xf32> to vector<32x128xf32>
    %69 = arith.addf %65, %68 : vector<32x128xf32>
    %cst_30 = arith.constant 0.000000e+00 : f32
    %70 = vector.broadcast %cst_30 : f32 to vector<32x128xf32>
    %71 = arith.maximumf %69, %70 : vector<32x128xf32>
    %c1_i32_31 = arith.constant 1 : i32
    %72 = tpu.dynamic_rotate %71 by %c1_i32_31 dim 0 : vector<32x128xf32>, i32 -> vector<32x128xf32>
    %cst_32 = arith.constant 0.000000e+00 : f32
    %73 = vector.broadcast %cst_32 : f32 to vector<32x128xf32>
    %74 = arith.select %18, %72, %73 : vector<32x128xi1>, vector<32x128xf32>
    %c31_i32_33 = arith.constant 31 : i32
    %75 = tpu.dynamic_rotate %71 by %c31_i32_33 dim 0 : vector<32x128xf32>, i32 -> vector<32x128xf32>
    %cst_34 = arith.constant 0.000000e+00 : f32
    %76 = vector.broadcast %cst_34 : f32 to vector<32x128xf32>
    %77 = arith.select %20, %75, %76 : vector<32x128xi1>, vector<32x128xf32>
    %78 = tpu.concatenate %74, %71, %77 in 1 : vector<32x128xf32>, vector<32x128xf32>, vector<32x128xf32> -> vector<32x384xf32>
    %c3 = arith.constant 3 : index
    %c0_35 = arith.constant 0 : index
    %c0_36 = arith.constant 0 : index
    %79 = vector.load %arg2[%c3, %c0_35, %c0_36] : memref<4x384x128xf32, #tpu.memory_space<vmem>>, vector<1x384x128xf32>
    %80 = vector.shape_cast %79 : vector<1x384x128xf32> to vector<384x128xf32>
    %cst_37 = arith.constant dense<0.000000e+00> : vector<32x128xf32>
    %81 = tpu.matmul %78, %80, %cst_37 {dimension_numbers = #tpu.dot_dimension_numbers<[1], [0], [0], [1], [0, 0, 1, 1], [], []>} : vector<32x384xf32>, vector<384x128xf32>, vector<32x128xf32> -> vector<32x128xf32>
    %82 = vector.extract_strided_slice %21 {offsets = [3, 0, 0], sizes = [1, 1, 128], strides = [1, 1, 1]} : vector<4x1x128xf32> to vector<1x1x128xf32>
    %83 = vector.shape_cast %82 : vector<1x1x128xf32> to vector<1x128xf32>
    %84 = vector.broadcast %83 : vector<1x128xf32> to vector<32x128xf32>
    %85 = arith.addf %81, %84 : vector<32x128xf32>
    %86 = arith.addf %55, %85 : vector<32x128xf32>
    %cst_38 = arith.constant 0.000000e+00 : f32
    %87 = vector.broadcast %cst_38 : f32 to vector<32x128xf32>
    %88 = arith.maximumf %86, %87 : vector<32x128xf32>
    %c0_39 = arith.constant 0 : index
    %c0_40 = arith.constant 0 : index
    %89 = vector.load %arg4[%c0_39, %c0_40] : memref<32x128xf32, #tpu.memory_space<vmem>>, vector<32x128xf32>
    tpu.vector_store %arg4[%c0_39, %c0_40], %88 {strides = array<i32>} : memref<32x128xf32, #tpu.memory_space<vmem>>, vector<32x128xf32>,
    return
  }
  func.func @transform_0(%arg0: i32) -> (i32, i32) {
    %c0_i32 = arith.constant 0 : i32
    %c0_i32_0 = arith.constant 0 : i32
    return %arg0, %c0_i32 : i32, i32
  }
  func.func @transform_1(%arg0: i32) -> (i32, i32, i32) {
    %c0_i32 = arith.constant 0 : i32
    %c0_i32_0 = arith.constant 0 : i32
    %c0_i32_1 = arith.constant 0 : i32
    %c0_i32_2 = arith.constant 0 : i32
    return %c0_i32, %c0_i32_0, %c0_i32_1 : i32, i32, i32
  }
  func.func @transform_2(%arg0: i32) -> (i32, i32, i32) {
    %c0_i32 = arith.constant 0 : i32
    %c0_i32_0 = arith.constant 0 : i32
    %c0_i32_1 = arith.constant 0 : i32
    %c0_i32_2 = arith.constant 0 : i32
    return %c0_i32, %c0_i32_0, %c0_i32_1 : i32, i32, i32
  }
  func.func @transform_3(%arg0: i32) -> (i32, i32) {
    %c0_i32 = arith.constant 0 : i32
    %c0_i32_0 = arith.constant 0 : i32
    return %arg0, %c0_i32 : i32, i32
  }
}

</mosaic_0001>

<llo_original>
// kernel: tile.23
$region0: #{tile.23}
  #allocation0 [shape = 's32[1]{0}', space=sflag, size = 0x4, scoped, tag = 'scoped memory for tile.23']
  %s0 = inlined_call_operand.vmem [shape: f32[8], index: 0, kind: input, shape index: {}]
  %s1 = inlined_call_operand.vmem [shape: f32[16,8], index: 1, kind: output, shape index: {}]
  // Predicated region
  $region2: #{tile.23} parent=0 // pred_check
    _
  $region3: #{tile.23} parent=0 // pred_check_branch
    %3 = sbr.rel (0) target = $region5
  $region4: #{tile.23} parent=0 // pred_region
    _
  $region5: #{tile.23} parent=0 // pred_fallthru
    _
  %v4 = vld [vmem:[%s0] ss:$0 sm:$0xff]
  %5 = vst [vmem:[%s1] sm:$0xff] %v4
  %s6 = scalar_lea.vmem %s1, 8
  %7 = vst [vmem:[%s6] sm:$0xff] %v4

// kernel: tile.36
$region0: #{tile.36}
  %s0 = inlined_call_operand.vmem [shape: f32[16,8], index: 0, kind: input, shape index: {}]
  %s1 = inlined_call_operand.vmem [shape: f32[1,128], index: 1, kind: output, shape index: {}]
  $region1: #{tile.36} parent=0
    #allocation0 [shape = 'u8[4096]{0}', space=vmem, size = 0x1000, scoped, tag = 'scoped mem for output reshape']
    %v2 = vld [vmem:[%s0] sm:$0x1]
    %vm3 = vcmask 64512
    %4 = vst.msk [vmem:[#allocation0] sm:$0x1] %vm3, %v2
    %s5 = scalar_lea.vmem %s0, 15
    %v6 = vld [vmem:[%s5] sm:$0x1]
    %7 = vrot.lane.b32.xlu0 %v6, 120
    %v8 = vpop.permute.xlu0 %7
    %vm9 = vcmask 1048512
    %10 = vst.msk [vmem:[#allocation0] sm:$0x1] %vm9, %v8
    %s11 = scalar_lea.vmem %s0, 14
    %v12 = vld [vmem:[%s11] sm:$0x1]
    %13 = vrot.lane.b32.xlu0 %v12, 112
    %v14 = vpop.permute.xlu0 %13
    %vm15 = vcmask 982912
    %16 = vst.msk [vmem:[#allocation0] sm:$0x1] %vm15, %v14
    %s17 = scalar_lea.vmem %s0, 13
    %v18 = vld [vmem:[%s17] sm:$0x1]
    %19 = vrot.lane.b32.xlu0 %v18, 104
    %v20 = vpop.permute.xlu0 %19
    %vm21 = vcmask 917312
    %22 = vst.msk [vmem:[#allocation0] sm:$0x1] %vm21, %v20
    %s23 = scalar_lea.vmem %s0, 12
    %v24 = vld [vmem:[%s23] sm:$0x1]
    %25 = vrot.lane.b32.xlu0 %v24, 96
    %v26 = vpop.permute.xlu0 %25
    %vm27 = vcmask 851712
    %28 = vst.msk [vmem:[#allocation0] sm:$0x1] %vm27, %v26
    %s29 = scalar_lea.vmem %s0, 11
    %v30 = vld [vmem:[%s29] sm:$0x1]
    %31 = vrot.lane.b32.xlu0 %v30, 88
    %v32 = vpop.permute.xlu0 %31
    %vm33 = vcmask 786112
    %34 = vst.msk [vmem:[#allocation0] sm:$0x1] %vm33, %v32
    %s35 = scalar_lea.vmem %s0, 10
    %v36 = vld [vmem:[%s35] sm:$0x1]
    %37 = vrot.lane.b32.xlu0 %v36, 80
    %v38 = vpop.permute.xlu0 %37
    %vm39 = vcmask 720512
    %40 = vst.msk [vmem:[#allocation0] sm:$0x1] %vm39, %v38
    %s41 = scalar_lea.vmem %s0, 9
    %v42 = vld [vmem:[%s41] sm:$0x1]
    %43 = vrot.lane.b32.xlu0 %v42, 72
    %v44 = vpop.permute.xlu0 %43
    %vm45 = vcmask 654912
    %46 = vst.msk [vmem:[#allocation0] sm:$0x1] %vm45, %v44
    %s47 = scalar_lea.vmem %s0, 8
    %v48 = vld [vmem:[%s47] sm:$0x1]
    %49 = vrot.lane.b32.xlu0 %v48, 64
    %v50 = vpop.permute.xlu0 %49
    %vm51 = vcmask 589312
    %52 = vst.msk [vmem:[#allocation0] sm:$0x1] %vm51, %v50
    %s53 = scalar_lea.vmem %s0, 7
    %v54 = vld [vmem:[%s53] sm:$0x1]
    %55 = vrot.lane.b32.xlu0 %v54, 56
    %v56 = vpop.permute.xlu0 %55
    %vm57 = vcmask 523712
    %58 = vst.msk [vmem:[#allocation0] sm:$0x1] %vm57, %v56
    %s59 = scalar_lea.vmem %s0, 6
    %v60 = vld [vmem:[%s59] sm:$0x1]
    %61 = vrot.lane.b32.xlu0 %v60, 48
    %v62 = vpop.permute.xlu0 %61
    %vm63 = vcmask 458112
    %64 = vst.msk [vmem:[#allocation0] sm:$0x1] %vm63, %v62
    %s65 = scalar_lea.vmem %s0, 5
    %v66 = vld [vmem:[%s65] sm:$0x1]
    %67 = vrot.lane.b32.xlu0 %v66, 40
    %v68 = vpop.permute.xlu0 %67
    %vm69 = vcmask 392512
    %70 = vst.msk [vmem:[#allocation0] sm:$0x1] %vm69, %v68
    %s71 = scalar_lea.vmem %s0, 4
    %v72 = vld [vmem:[%s71] sm:$0x1]
    %73 = vrot.lane.b32.xlu0 %v72, 32
    %v74 = vpop.permute.xlu0 %73
    %vm75 = vcmask 326912
    %76 = vst.msk [vmem:[#allocation0] sm:$0x1] %vm75, %v74
    %s77 = scalar_lea.vmem %s0, 3
    %v78 = vld [vmem:[%s77] sm:$0x1]
    %79 = vrot.lane.b32.xlu0 %v78, 24
    %v80 = vpop.permute.xlu0 %79
    %vm81 = vcmask 261312
    %82 = vst.msk [vmem:[#allocation0] sm:$0x1] %vm81, %v80
    %s83 = scalar_lea.vmem %s0, 2
    %v84 = vld [vmem:[%s83] sm:$0x1]
    %85 = vrot.lane.b32.xlu0 %v84, 16
    %v86 = vpop.permute.xlu0 %85
    %vm87 = vcmask 195712
    %88 = vst.msk [vmem:[#allocation0] sm:$0x1] %vm87, %v86
    %s89 = scalar_lea.vmem %s0, 1
    %v90 = vld [vmem:[%s89] sm:$0x1]
    %91 = vrot.lane.b32.xlu0 %v90, 8
    %v92 = vpop.permute.xlu0 %91
    %vm93 = vcmask 130112
    %94 = vst.msk [vmem:[#allocation0] sm:$0x1] %vm93, %v92
    %s96 = sshllo.u32 0, 1
    %v98 = vld [vmem:[#allocation0] sm:%s96]
    %s99 = sshllo.u32 0, 1
    %100 = vst [vmem:[%s1] sm:%s99] %v98

// kernel: residual_layer_forward.1
$region0: #{residual_layer_forward.1}
  #allocation0 [shape = 'u32[]', space=smem, size = 0x4, offset = 0x4, fixed_abs, tag = 'smem constant byte address 0x4 - core index']
  #allocation1 [shape = 'u32[144,128]{1,0:T(1,128)}', space=vmem, size = 0x12000, scoped, tag = 'internal scratch']
  %s0 = inlined_call_operand.vmem [shape: f32[32,128], index: 0, kind: input, shape index: {}]
  %s1 = inlined_call_operand.vmem [shape: f32[4,384,128], index: 1, kind: input, shape index: {}]
  %s2 = inlined_call_operand.vmem [shape: f32[4,1,128], index: 2, kind: input, shape index: {}]
  %s3 = inlined_call_operand.vmem [shape: f32[32,128], index: 3, kind: output, shape index: {}]
  %s4 = sld [smem:[#allocation0]]
  $region22: #{residual_layer_forward.1} parent=0
    _
  %s6 = ssub.s32 1, %s4
  %s7 = scalar_select 0, %s6, %s4
  // Predicated region
  $region2: #{residual_layer_forward.1} parent=0 // pred_check
    _
  $region3: #{residual_layer_forward.1} parent=0 // pred_check_branch
    %9 = sbr.rel (0) target = $region5
  $region4: #{residual_layer_forward.1} parent=0 // pred_region
    _
  $region5: #{residual_layer_forward.1} parent=0 // pred_fallthru
    _
  // Predicated region
  $region6: #{residual_layer_forward.1} parent=0 // pred_check
    _
  $region7: #{residual_layer_forward.1} parent=0 // pred_check_branch
    %11 = sbr.rel (0) target = $region9
  $region8: #{residual_layer_forward.1} parent=0 // pred_region
    _
  $region9: #{residual_layer_forward.1} parent=0 // pred_fallthru
    _
  // Predicated region
  $region10: #{residual_layer_forward.1} parent=0 // pred_check
    _
  $region11: #{residual_layer_forward.1} parent=0 // pred_check_branch
    %13 = sbr.rel (0) target = $region13
  $region12: #{residual_layer_forward.1} parent=0 // pred_region
    _
  $region13: #{residual_layer_forward.1} parent=0 // pred_fallthru
    _
  %v14 = vlaneseq
  %v15 = vshrl.u32 %v14, 7
  %v16 = vadd.s32 %v15, 8
  %v17 = vadd.s32 %v15, 16
  %v18 = vadd.s32 %v15, 24
  %vm19 = vcmp.lt.s32.totalorder %v15, 0
  %v20 = vsub.s32 0, %v15
  %v21 = vsel %vm19, %v20, %v15
  %v22 = vshrl.u32 %v21, 4
  %v23 = vand.u32 %v21, 15
  %v24 = vsub.s32 0, %v23
  %v25 = vsel %vm19, %v24, %v23
  %vm26 = vcmp.lt.s32.totalorder %v16, 0
  %v27 = vsub.s32 0, %v16
  %v28 = vsel %vm26, %v27, %v16
  %v29 = vshrl.u32 %v28, 4
  %v30 = vand.u32 %v28, 15
  %v31 = vsub.s32 0, %v30
  %v32 = vsel %vm26, %v31, %v30
  %vm33 = vcmp.lt.s32.totalorder %v17, 0
  %v34 = vsub.s32 0, %v17
  %v35 = vsel %vm33, %v34, %v17
  %v36 = vshrl.u32 %v35, 4
  %v37 = vand.u32 %v35, 15
  %v38 = vsub.s32 0, %v37
  %v39 = vsel %vm33, %v38, %v37
  %vm40 = vcmp.lt.s32.totalorder %v18, 0
  %v41 = vsub.s32 0, %v18
  %v42 = vsel %vm40, %v41, %v18
  %v43 = vshrl.u32 %v42, 4
  %v44 = vand.u32 %v42, 15
  %v45 = vsub.s32 0, %v44
  %v46 = vsel %vm40, %v45, %v44
  %vm47 = vcmp.ne.s32.totalorder %v25, 0
  %vm48 = vcmp.ne.s32.totalorder %v32, 0
  %vm49 = vcmp.ne.s32.totalorder %v39, 0
  %vm50 = vcmp.ne.s32.totalorder %v46, 0
  %vm51 = vcmp.lt.s32.totalorder %v25, 0
  %vm52 = vcmp.lt.s32.totalorder %v32, 0
  %vm53 = vcmp.lt.s32.totalorder %v39, 0
  %vm54 = vcmp.lt.s32.totalorder %v46, 0
  %vm55 = vmand %vm51, %vm47
  %vm56 = vmand %vm52, %vm48
  %vm57 = vmand %vm53, %vm49
  %vm58 = vmand %vm54, %vm50
  %v59 = vadd.s32 %v25, 16
  %v60 = vadd.s32 %v32, 16
  %v61 = vadd.s32 %v39, 16
  %v62 = vadd.s32 %v46, 16
  %v63 = vsel %vm55, %v59, %v25
  %v64 = vsel %vm56, %v60, %v32
  %v65 = vsel %vm57, %v61, %v39
  %v66 = vsel %vm58, %v62, %v46
  %vm67 = vcmp.gt.s32.totalorder %v63, 0
  %vm68 = vcmp.gt.s32.totalorder %v64, 0
  %vm69 = vcmp.gt.s32.totalorder %v65, 0
  %vm70 = vcmp.gt.s32.totalorder %v66, 0
  %vm71 = vcmp.lt.s32.totalorder %v63, 15
  %vm72 = vcmp.lt.s32.totalorder %v64, 15
  %vm73 = vcmp.lt.s32.totalorder %v65, 15
  %vm74 = vcmp.lt.s32.totalorder %v66, 15
  %v75 = vld [vmem:[%s2] sm:$0x1]
  %v76 = vld [vmem:[%s2 + $0x1] sm:$0x1]
  %v77 = vld [vmem:[%s2 + $0x2] sm:$0x1]
  %v78 = vld [vmem:[%s2 + $0x3] sm:$0x1]
  %v79 = vld [vmem:[%s0] sm:$0xff]
  %v80 = vld [vmem:[%s0 + $0x8] sm:$0xff]
  %v81 = vld [vmem:[%s0 + $0x10] sm:$0xff]
  %v82 = vld [vmem:[%s0 + $0x18] sm:$0xff]
  %v83 = vrot.slane %v79, 7
  %v84 = vrot.slane %v80, 7
  %v85 = vrot.slane %v81, 7
  %v86 = vrot.slane %v82, 7
  %vm87 = vcmp.lt.s32.totalorder %v15, 1
  %v88 = vsel %vm87, %v85, %v86
  %v89 = vsel %vm87, %v84, %v85
  %v90 = vsel %vm87, %v83, %v84
  %v91 = vsel %vm87, %v86, %v83
  %v92 = vsel %vm67, %v91, 0.0
  %v93 = vsel %vm68, %v90, 0.0
  %v94 = vsel %vm69, %v89, 0.0
  %v95 = vsel %vm70, %v88, 0.0
  %v96 = vrot.slane %v79, 1
  %v97 = vrot.slane %v80, 1
  %v98 = vrot.slane %v81, 1
  %v99 = vrot.slane %v82, 1
  %vm100 = vcmp.lt.s32.totalorder %v15, 7
  %v101 = vsel %vm100, %v98, %v99
  %v102 = vsel %vm100, %v97, %v98
  %v103 = vsel %vm100, %v96, %v97
  %v104 = vsel %vm100, %v99, %v96
  %v105 = vsel %vm71, %v103, 0.0
  %v106 = vsel %vm72, %v102, 0.0
  %v107 = vsel %vm73, %v101, 0.0
  %v108 = vsel %vm74, %v104, 0.0
  %v109 = vld [vmem:[%s1] sm:$0xff]
  %v110 = vld [vmem:[%s1 + $0x8] sm:$0xff]
  %v111 = vld [vmem:[%s1 + $0x10] sm:$0xff]
  %v112 = vld [vmem:[%s1 + $0x18] sm:$0xff]
  %v113 = vld [vmem:[%s1 + $0x20] sm:$0xff]
  %v114 = vld [vmem:[%s1 + $0x28] sm:$0xff]
  %v115 = vld [vmem:[%s1 + $0x30] sm:$0xff]
  %v116 = vld [vmem:[%s1 + $0x38] sm:$0xff]
  %v117 = vld [vmem:[%s1 + $0x40] sm:$0xff]
  %v118 = vld [vmem:[%s1 + $0x48] sm:$0xff]
  %v119 = vld [vmem:[%s1 + $0x50] sm:$0xff]
  %v120 = vld [vmem:[%s1 + $0x58] sm:$0xff]
  %v121 = vld [vmem:[%s1 + $0x60] sm:$0xff]
  %v122 = vld [vmem:[%s1 + $0x68] sm:$0xff]
  %v123 = vld [vmem:[%s1 + $0x70] sm:$0xff]
  %v124 = vld [vmem:[%s1 + $0x78] sm:$0xff]
  %v125 = vld [vmem:[%s1 + $0x80] sm:$0xff]
  %v126 = vld [vmem:[%s1 + $0x88] sm:$0xff]
  %v127 = vld [vmem:[%s1 + $0x90] sm:$0xff]
  %v128 = vld [vmem:[%s1 + $0x98] sm:$0xff]
  %v129 = vld [vmem:[%s1 + $0xa0] sm:$0xff]
  %v130 = vld [vmem:[%s1 + $0xa8] sm:$0xff]
  %v131 = vld [vmem:[%s1 + $0xb0] sm:$0xff]
  %v132 = vld [vmem:[%s1 + $0xb8] sm:$0xff]
  %v133 = vld [vmem:[%s1 + $0xc0] sm:$0xff]
  %v134 = vld [vmem:[%s1 + $0xc8] sm:$0xff]
  %v135 = vld [vmem:[%s1 + $0xd0] sm:$0xff]
  %v136 = vld [vmem:[%s1 + $0xd8] sm:$0xff]
  %v137 = vld [vmem:[%s1 + $0xe0] sm:$0xff]
  %v138 = vld [vmem:[%s1 + $0xe8] sm:$0xff]
  %v139 = vld [vmem:[%s1 + $0xf0] sm:$0xff]
  %v140 = vld [vmem:[%s1 + $0xf8] sm:$0xff]
  %v141 = vld [vmem:[%s1 + $0x100] sm:$0xff]
  %v142 = vld [vmem:[%s1 + $0x108] sm:$0xff]
  %v143 = vld [vmem:[%s1 + $0x110] sm:$0xff]
  %v144 = vld [vmem:[%s1 + $0x118] sm:$0xff]
  %v145 = vld [vmem:[%s1 + $0x120] sm:$0xff]
  %v146 = vld [vmem:[%s1 + $0x128] sm:$0xff]
  %v147 = vld [vmem:[%s1 + $0x130] sm:$0xff]
  %v148 = vld [vmem:[%s1 + $0x138] sm:$0xff]
  %v149 = vld [vmem:[%s1 + $0x140] sm:$0xff]
  %v150 = vld [vmem:[%s1 + $0x148] sm:$0xff]
  %v151 = vld [vmem:[%s1 + $0x150] sm:$0xff]
  %v152 = vld [vmem:[%s1 + $0x158] sm:$0xff]
  %v153 = vld [vmem:[%s1 + $0x160] sm:$0xff]
  %v154 = vld [vmem:[%s1 + $0x168] sm:$0xff]
  %v155 = vld [vmem:[%s1 + $0x170] sm:$0xff]
  %v156 = vld [vmem:[%s1 + $0x178] sm:$0xff]
  %v158 = vlaneseq
  %v159 = vshrl.u32 %v158, 7
  %v160 = vsub.s32 0, %v159
  %v161 = vrot.slane %v75, %v160
  %163 = vmatprep.subr.mxu0 0.0
  %164 = vmatpush1.msra.mxu0 %v109
  %165 = vmatprep.subr.mxu0 0.0
  %166 = vmatpush1.msra.mxu0 %v110
  %167 = vmatprep.subr.mxu0 0.0
  %168 = vmatpush1.msra.mxu0 %v111
  %169 = vmatprep.subr.mxu0 0.0
  %170 = vmatpush1.msra.mxu0 %v112
  %171 = vmatprep.subr.mxu0 0.0
  %172 = vmatpush1.msra.mxu0 %v113
  %173 = vmatprep.subr.mxu0 0.0
  %174 = vmatpush1.msra.mxu0 %v114
  %175 = vmatprep.subr.mxu0 0.0
  %176 = vmatpush1.msra.mxu0 %v115
  %177 = vmatprep.subr.mxu0 0.0
  %178 = vmatpush1.msra.mxu0 %v116
  %179 = vmatprep.subr.mxu0 0.0
  %180 = vmatpush1.msra.mxu0 %v117
  %181 = vmatprep.subr.mxu0 0.0
  %182 = vmatpush1.msra.mxu0 %v118
  %183 = vmatprep.subr.mxu0 0.0
  %184 = vmatpush1.msra.mxu0 %v119
  %185 = vmatprep.subr.mxu0 0.0
  %186 = vmatpush1.msra.mxu0 %v120
  %187 = vmatprep.subr.mxu0 0.0
  %188 = vmatpush1.msra.mxu0 %v121
  %189 = vmatprep.subr.mxu0 0.0
  %190 = vmatpush1.msra.mxu0 %v122
  %191 = vmatprep.subr.mxu0 0.0
  %192 = vmatpush1.msra.mxu0 %v123
  %193 = vmatprep.subr.mxu0 0.0
  %194 = vmatpush1.msra.mxu0 %v124
  %195 = vmatprep.subr.mxu0 0.0
  %196 = vmatpush1.msra.mxu0 %v125
  %197 = vmatprep.subr.mxu0 0.0
  %198 = vmatpush1.msra.mxu0 %v126
  %199 = vmatprep.subr.mxu0 0.0
  %200 = vmatpush1.msra.mxu0 %v127
  %201 = vmatprep.subr.mxu0 0.0
  %202 = vmatpush1.msra.mxu0 %v128
  %203 = vmatprep.subr.mxu0 0.0
  %204 = vmatpush1.msra.mxu0 %v129
  %205 = vmatprep.subr.mxu0 0.0
  %206 = vmatpush1.msra.mxu0 %v130
  %207 = vmatprep.subr.mxu0 0.0
  %208 = vmatpush1.msra.mxu0 %v131
  %209 = vmatprep.subr.mxu0 0.0
  %210 = vmatpush1.msra.mxu0 %v132
  %211 = vmatprep.subr.mxu0 0.0
  %212 = vmatpush1.msra.mxu0 %v133
  %213 = vmatprep.subr.mxu0 0.0
  %214 = vmatpush1.msra.mxu0 %v134
  %215 = vmatprep.subr.mxu0 0.0
  %216 = vmatpush1.msra.mxu0 %v135
  %217 = vmatprep.subr.mxu0 0.0
  %218 = vmatpush1.msra.mxu0 %v136
  %219 = vmatprep.subr.mxu0 0.0
  %220 = vmatpush1.msra.mxu0 %v137
  %221 = vmatprep.subr.mxu0 0.0
  %222 = vmatpush1.msra.mxu0 %v138
  %223 = vmatprep.subr.mxu0 0.0
  %224 = vmatpush1.msra.mxu0 %v139
  %225 = vmatprep.subr.mxu0 0.0
  %226 = vmatpush1.msra.mxu0 %v140
  %227 = vmatprep.mubr.f32.mxu0 %v79
  %228 = vmatmul.mubr.f32.gmra.mrb[0].mxu0 %v92
  %v229 = vpop.f32.mrb[0].mxu0
  %v230 = vadd.f32 %v161, %v229
  %v231 = vpop.f32.mrb[0].mxu0
  %232 = vmatprep.mubr.f32.mxu0 %v80
  %233 = vmatmul.mubr.f32.gmra.mrb[0].mxu0 %v93
  %v234 = vpop.f32.mrb[0].mxu0
  %v235 = vadd.f32 %v161, %v234
  %v236 = vpop.f32.mrb[0].mxu0
  %237 = vmatprep.mubr.f32.mxu0 %v81
  %238 = vmatmul.mubr.f32.gmra.mrb[0].mxu0 %v94
  %v239 = vpop.f32.mrb[0].mxu0
  %v240 = vadd.f32 %v161, %v239
  %v241 = vpop.f32.mrb[0].mxu0
  %242 = vmatprep.mubr.f32.mxu0 %v82
  %243 = vmatmul.mubr.f32.gmra.mrb[0].mxu0 %v95
  %v244 = vpop.f32.mrb[0].mxu0
  %v245 = vadd.f32 %v161, %v244
  %v246 = vpop.f32.mrb[0].mxu0
  %247 = vdwg.mxu0
  %248 = vmatprep.subr.mxu0 0.0
  %249 = vmatpush1.msra.mxu0 %v141
  %250 = vmatprep.subr.mxu0 0.0
  %251 = vmatpush1.msra.mxu0 %v142
  %252 = vmatprep.subr.mxu0 0.0
  %253 = vmatpush1.msra.mxu0 %v143
  %254 = vmatprep.subr.mxu0 0.0
  %255 = vmatpush1.msra.mxu0 %v144
  %256 = vmatprep.subr.mxu0 0.0
  %257 = vmatpush1.msra.mxu0 %v145
  %258 = vmatprep.subr.mxu0 0.0
  %259 = vmatpush1.msra.mxu0 %v146
  %260 = vmatprep.subr.mxu0 0.0
  %261 = vmatpush1.msra.mxu0 %v147
  %262 = vmatprep.subr.mxu0 0.0
  %263 = vmatpush1.msra.mxu0 %v148
  %264 = vmatprep.subr.mxu0 0.0
  %265 = vmatpush1.msra.mxu0 %v149
  %266 = vmatprep.subr.mxu0 0.0
  %267 = vmatpush1.msra.mxu0 %v150
  %268 = vmatprep.subr.mxu0 0.0
  %269 = vmatpush1.msra.mxu0 %v151
  %270 = vmatprep.subr.mxu0 0.0
  %271 = vmatpush1.msra.mxu0 %v152
  %272 = vmatprep.subr.mxu0 0.0
  %273 = vmatpush1.msra.mxu0 %v153
  %274 = vmatprep.subr.mxu0 0.0
  %275 = vmatpush1.msra.mxu0 %v154
  %276 = vmatprep.subr.mxu0 0.0
  %277 = vmatpush1.msra.mxu0 %v155
  %278 = vmatprep.subr.mxu0 0.0
  %279 = vmatpush1.msra.mxu0 %v156
  %280 = vmatprep.subr.mxu0 0.0
  %281 = vmatpush1.msra.mxu0 0.0
  %282 = vmatprep.subr.mxu0 0.0
  %283 = vmatpush1.msra.mxu0 0.0
  %284 = vmatprep.subr.mxu0 0.0
  %285 = vmatpush1.msra.mxu0 0.0
  %286 = vmatprep.subr.mxu0 0.0
  %287 = vmatpush1.msra.mxu0 0.0
  %288 = vmatprep.subr.mxu0 0.0
  %289 = vmatpush1.msra.mxu0 0.0
  %290 = vmatprep.subr.mxu0 0.0
  %291 = vmatpush1.msra.mxu0 0.0
  %292 = vmatprep.subr.mxu0 0.0
  %293 = vmatpush1.msra.mxu0 0.0
  %294 = vmatprep.subr.mxu0 0.0
  %295 = vmatpush1.msra.mxu0 0.0
  %296 = vmatprep.subr.mxu0 0.0
  %297 = vmatpush1.msra.mxu0 0.0
  %298 = vmatprep.subr.mxu0 0.0
  %299 = vmatpush1.msra.mxu0 0.0
  %300 = vmatprep.subr.mxu0 0.0
  %301 = vmatpush1.msra.mxu0 0.0
  %302 = vmatprep.subr.mxu0 0.0
  %303 = vmatpush1.msra.mxu0 0.0
  %304 = vmatprep.subr.mxu0 0.0
  %305 = vmatpush1.msra.mxu0 0.0
  %306 = vmatprep.subr.mxu0 0.0
  %307 = vmatpush1.msra.mxu0 0.0
  %308 = vmatprep.subr.mxu0 0.0
  %309 = vmatpush1.msra.mxu0 0.0
  %310 = vmatprep.subr.mxu0 0.0
  %311 = vmatpush1.msra.mxu0 0.0
  %312 = vmatprep.mubr.f32.mxu0 0.0
  %313 = vmatmul.mubr.f32.gmra.mrb[0].mxu0 %v105
  %v314 = vpop.f32.mrb[0].mxu0
  %v315 = vadd.f32 %v230, %v314
  %v316 = vpop.f32.mrb[0].mxu0
  %317 = vmatprep.mubr.f32.mxu0 0.0
  %318 = vmatmul.mubr.f32.gmra.mrb[0].mxu0 %v106
  %v319 = vpop.f32.mrb[0].mxu0
  %v320 = vadd.f32 %v235, %v319
  %v321 = vpop.f32.mrb[0].mxu0
  %322 = vmatprep.mubr.f32.mxu0 0.0
  %323 = vmatmul.mubr.f32.gmra.mrb[0].mxu0 %v107
  %v324 = vpop.f32.mrb[0].mxu0
  %v325 = vadd.f32 %v240, %v324
  %v326 = vpop.f32.mrb[0].mxu0
  %327 = vmatprep.mubr.f32.mxu0 0.0
  %328 = vmatmul.mubr.f32.gmra.mrb[0].mxu0 %v108
  %v329 = vpop.f32.mrb[0].mxu0
  %v330 = vadd.f32 %v245, %v329
  %v331 = vpop.f32.mrb[0].mxu0
  %332 = vdwg.mxu0
  %v333 = vmax.f32 %v315, 0.0
  %v334 = vmax.f32 %v320, 0.0
  %v335 = vmax.f32 %v325, 0.0
  %v336 = vmax.f32 %v330, 0.0
  %v337 = vrot.slane %v333, 7
  %v338 = vrot.slane %v334, 7
  %v339 = vrot.slane %v335, 7
  %v340 = vrot.slane %v336, 7
  %v341 = vsel %vm87, %v339, %v340
  %v342 = vsel %vm87, %v338, %v339
  %v343 = vsel %vm87, %v337, %v338
  %v344 = vsel %vm87, %v340, %v337
  %v345 = vsel %vm67, %v344, 0.0
  %v346 = vsel %vm68, %v343, 0.0
  %v347 = vsel %vm69, %v342, 0.0
  %v348 = vsel %vm70, %v341, 0.0
  %v349 = vrot.slane %v333, 1
  %v350 = vrot.slane %v334, 1
  %v351 = vrot.slane %v335, 1
  %v352 = vrot.slane %v336, 1
  %v353 = vsel %vm100, %v351, %v352
  %v354 = vsel %vm100, %v350, %v351
  %v355 = vsel %vm100, %v349, %v350
  %v356 = vsel %vm100, %v352, %v349
  %v357 = vsel %vm71, %v355, 0.0
  %v358 = vsel %vm72, %v354, 0.0
  %v359 = vsel %vm73, %v353, 0.0
  %v360 = vsel %vm74, %v356, 0.0
  %s361 = scalar_lea.vmem %s1, 384
  %v362 = vld [vmem:[%s361] sm:$0xff]
  %v363 = vld [vmem:[%s361 + $0x8] sm:$0xff]
  %v364 = vld [vmem:[%s361 + $0x10] sm:$0xff]
  %v365 = vld [vmem:[%s361 + $0x18] sm:$0xff]
  %v366 = vld [vmem:[%s361 + $0x20] sm:$0xff]
  %v367 = vld [vmem:[%s361 + $0x28] sm:$0xff]
  %v368 = vld [vmem:[%s361 + $0x30] sm:$0xff]
  %v369 = vld [vmem:[%s361 + $0x38] sm:$0xff]
  %v370 = vld [vmem:[%s361 + $0x40] sm:$0xff]
  %v371 = vld [vmem:[%s361 + $0x48] sm:$0xff]
  %v372 = vld [vmem:[%s361 + $0x50] sm:$0xff]
  %v373 = vld [vmem:[%s361 + $0x58] sm:$0xff]
  %v374 = vld [vmem:[%s361 + $0x60] sm:$0xff]
  %v375 = vld [vmem:[%s361 + $0x68] sm:$0xff]
  %v376 = vld [vmem:[%s361 + $0x70] sm:$0xff]
  %v377 = vld [vmem:[%s361 + $0x78] sm:$0xff]
  %v378 = vld [vmem:[%s361 + $0x80] sm:$0xff]
  %v379 = vld [vmem:[%s361 + $0x88] sm:$0xff]
  %v380 = vld [vmem:[%s361 + $0x90] sm:$0xff]
  %v381 = vld [vmem:[%s361 + $0x98] sm:$0xff]
  %v382 = vld [vmem:[%s361 + $0xa0] sm:$0xff]
  %v383 = vld [vmem:[%s361 + $0xa8] sm:$0xff]
  %v384 = vld [vmem:[%s361 + $0xb0] sm:$0xff]
  %v385 = vld [vmem:[%s361 + $0xb8] sm:$0xff]
  %v386 = vld [vmem:[%s361 + $0xc0] sm:$0xff]
  %v387 = vld [vmem:[%s361 + $0xc8] sm:$0xff]
  %v388 = vld [vmem:[%s361 + $0xd0] sm:$0xff]
  %v389 = vld [vmem:[%s361 + $0xd8] sm:$0xff]
  %v390 = vld [vmem:[%s361 + $0xe0] sm:$0xff]
  %v391 = vld [vmem:[%s361 + $0xe8] sm:$0xff]
  %v392 = vld [vmem:[%s361 + $0xf0] sm:$0xff]
  %v393 = vld [vmem:[%s361 + $0xf8] sm:$0xff]
  %v394 = vld [vmem:[%s361 + $0x100] sm:$0xff]
  %v395 = vld [vmem:[%s361 + $0x108] sm:$0xff]
  %v396 = vld [vmem:[%s361 + $0x110] sm:$0xff]
  %v397 = vld [vmem:[%s361 + $0x118] sm:$0xff]
  %v398 = vld [vmem:[%s361 + $0x120] sm:$0xff]
  %v399 = vld [vmem:[%s361 + $0x128] sm:$0xff]
  %v400 = vld [vmem:[%s361 + $0x130] sm:$0xff]
  %v401 = vld [vmem:[%s361 + $0x138] sm:$0xff]
  %v402 = vld [vmem:[%s361 + $0x140] sm:$0xff]
  %v403 = vld [vmem:[%s361 + $0x148] sm:$0xff]
  %v404 = vld [vmem:[%s361 + $0x150] sm:$0xff]
  %v405 = vld [vmem:[%s361 + $0x158] sm:$0xff]
  %v406 = vld [vmem:[%s361 + $0x160] sm:$0xff]
  %v407 = vld [vmem:[%s361 + $0x168] sm:$0xff]
  %v408 = vld [vmem:[%s361 + $0x170] sm:$0xff]
  %v409 = vld [vmem:[%s361 + $0x178] sm:$0xff]
  %v411 = vlaneseq
  %v412 = vshrl.u32 %v411, 7
  %v413 = vsub.s32 0, %v412
  %v414 = vrot.slane %v76, %v413
  %416 = vmatprep.subr.mxu0 0.0
  %417 = vmatpush1.msra.mxu0 %v362
  %418 = vmatprep.subr.mxu0 0.0
  %419 = vmatpush1.msra.mxu0 %v363
  %420 = vmatprep.subr.mxu0 0.0
  %421 = vmatpush1.msra.mxu0 %v364
  %422 = vmatprep.subr.mxu0 0.0
  %423 = vmatpush1.msra.mxu0 %v365
  %424 = vmatprep.subr.mxu0 0.0
  %425 = vmatpush1.msra.mxu0 %v366
  %426 = vmatprep.subr.mxu0 0.0
  %427 = vmatpush1.msra.mxu0 %v367
  %428 = vmatprep.subr.mxu0 0.0
  %429 = vmatpush1.msra.mxu0 %v368
  %430 = vmatprep.subr.mxu0 0.0
  %431 = vmatpush1.msra.mxu0 %v369
  %432 = vmatprep.subr.mxu0 0.0
  %433 = vmatpush1.msra.mxu0 %v370
  %434 = vmatprep.subr.mxu0 0.0
  %435 = vmatpush1.msra.mxu0 %v371
  %436 = vmatprep.subr.mxu0 0.0
  %437 = vmatpush1.msra.mxu0 %v372
  %438 = vmatprep.subr.mxu0 0.0
  %439 = vmatpush1.msra.mxu0 %v373
  %440 = vmatprep.subr.mxu0 0.0
  %441 = vmatpush1.msra.mxu0 %v374
  %442 = vmatprep.subr.mxu0 0.0
  %443 = vmatpush1.msra.mxu0 %v375
  %444 = vmatprep.subr.mxu0 0.0
  %445 = vmatpush1.msra.mxu0 %v376
  %446 = vmatprep.subr.mxu0 0.0
  %447 = vmatpush1.msra.mxu0 %v377
  %448 = vmatprep.subr.mxu0 0.0
  %449 = vmatpush1.msra.mxu0 %v378
  %450 = vmatprep.subr.mxu0 0.0
  %451 = vmatpush1.msra.mxu0 %v379
  %452 = vmatprep.subr.mxu0 0.0
  %453 = vmatpush1.msra.mxu0 %v380
  %454 = vmatprep.subr.mxu0 0.0
  %455 = vmatpush1.msra.mxu0 %v381
  %456 = vmatprep.subr.mxu0 0.0
  %457 = vmatpush1.msra.mxu0 %v382
  %458 = vmatprep.subr.mxu0 0.0
  %459 = vmatpush1.msra.mxu0 %v383
  %460 = vmatprep.subr.mxu0 0.0
  %461 = vmatpush1.msra.mxu0 %v384
  %462 = vmatprep.subr.mxu0 0.0
  %463 = vmatpush1.msra.mxu0 %v385
  %464 = vmatprep.subr.mxu0 0.0
  %465 = vmatpush1.msra.mxu0 %v386
  %466 = vmatprep.subr.mxu0 0.0
  %467 = vmatpush1.msra.mxu0 %v387
  %468 = vmatprep.subr.mxu0 0.0
  %469 = vmatpush1.msra.mxu0 %v388
  %470 = vmatprep.subr.mxu0 0.0
  %471 = vmatpush1.msra.mxu0 %v389
  %472 = vmatprep.subr.mxu0 0.0
  %473 = vmatpush1.msra.mxu0 %v390
  %474 = vmatprep.subr.mxu0 0.0
  %475 = vmatpush1.msra.mxu0 %v391
  %476 = vmatprep.subr.mxu0 0.0
  %477 = vmatpush1.msra.mxu0 %v392
  %478 = vmatprep.subr.mxu0 0.0
  %479 = vmatpush1.msra.mxu0 %v393
  %480 = vmatprep.mubr.f32.mxu0 %v333
  %481 = vmatmul.mubr.f32.gmra.mrb[0].mxu0 %v345
  %v482 = vpop.f32.mrb[0].mxu0
  %v483 = vadd.f32 %v414, %v482
  %v484 = vpop.f32.mrb[0].mxu0
  %485 = vmatprep.mubr.f32.mxu0 %v334
  %486 = vmatmul.mubr.f32.gmra.mrb[0].mxu0 %v346
  %v487 = vpop.f32.mrb[0].mxu0
  %v488 = vadd.f32 %v414, %v487
  %v489 = vpop.f32.mrb[0].mxu0
  %490 = vmatprep.mubr.f32.mxu0 %v335
  %491 = vmatmul.mubr.f32.gmra.mrb[0].mxu0 %v347
  %v492 = vpop.f32.mrb[0].mxu0
  %v493 = vadd.f32 %v414, %v492
  %v494 = vpop.f32.mrb[0].mxu0
  %495 = vmatprep.mubr.f32.mxu0 %v336
  %496 = vmatmul.mubr.f32.gmra.mrb[0].mxu0 %v348
  %v497 = vpop.f32.mrb[0].mxu0
  %v498 = vadd.f32 %v414, %v497
  %v499 = vpop.f32.mrb[0].mxu0
  %500 = vdwg.mxu0
  %501 = vmatprep.subr.mxu0 0.0
  %502 = vmatpush1.msra.mxu0 %v394
  %503 = vmatprep.subr.mxu0 0.0
  %504 = vmatpush1.msra.mxu0 %v395
  %505 = vmatprep.subr.mxu0 0.0
  %506 = vmatpush1.msra.mxu0 %v396
  %507 = vmatprep.subr.mxu0 0.0
  %508 = vmatpush1.msra.mxu0 %v397
  %509 = vmatprep.subr.mxu0 0.0
  %510 = vmatpush1.msra.mxu0 %v398
  %511 = vmatprep.subr.mxu0 0.0
  %512 = vmatpush1.msra.mxu0 %v399
  %513 = vmatprep.subr.mxu0 0.0
  %514 = vmatpush1.msra.mxu0 %v400
  %515 = vmatprep.subr.mxu0 0.0
  %516 = vmatpush1.msra.mxu0 %v401
  %517 = vmatprep.subr.mxu0 0.0
  %518 = vmatpush1.msra.mxu0 %v402
  %519 = vmatprep.subr.mxu0 0.0
  %520 = vmatpush1.msra.mxu0 %v403
  %521 = vmatprep.subr.mxu0 0.0
  %522 = vmatpush1.msra.mxu0 %v404
  %523 = vmatprep.subr.mxu0 0.0
  %524 = vmatpush1.msra.mxu0 %v405
  %525 = vmatprep.subr.mxu0 0.0
  %526 = vmatpush1.msra.mxu0 %v406
  %527 = vmatprep.subr.mxu0 0.0
  %528 = vmatpush1.msra.mxu0 %v407
  %529 = vmatprep.subr.mxu0 0.0
  %530 = vmatpush1.msra.mxu0 %v408
  %531 = vmatprep.subr.mxu0 0.0
  %532 = vmatpush1.msra.mxu0 %v409
  %533 = vmatprep.subr.mxu0 0.0
  %534 = vmatpush1.msra.mxu0 0.0
  %535 = vmatprep.subr.mxu0 0.0
  %536 = vmatpush1.msra.mxu0 0.0
  %537 = vmatprep.subr.mxu0 0.0
  %538 = vmatpush1.msra.mxu0 0.0
  %539 = vmatprep.subr.mxu0 0.0
  %540 = vmatpush1.msra.mxu0 0.0
  %541 = vmatprep.subr.mxu0 0.0
  %542 = vmatpush1.msra.mxu0 0.0
  %543 = vmatprep.subr.mxu0 0.0
  %544 = vmatpush1.msra.mxu0 0.0
  %545 = vmatprep.subr.mxu0 0.0
  %546 = vmatpush1.msra.mxu0 0.0
  %547 = vmatprep.subr.mxu0 0.0
  %548 = vmatpush1.msra.mxu0 0.0
  %549 = vmatprep.subr.mxu0 0.0
  %550 = vmatpush1.msra.mxu0 0.0
  %551 = vmatprep.subr.mxu0 0.0
  %552 = vmatpush1.msra.mxu0 0.0
  %553 = vmatprep.subr.mxu0 0.0
  %554 = vmatpush1.msra.mxu0 0.0
  %555 = vmatprep.subr.mxu0 0.0
  %556 = vmatpush1.msra.mxu0 0.0
  %557 = vmatprep.subr.mxu0 0.0
  %558 = vmatpush1.msra.mxu0 0.0
  %559 = vmatprep.subr.mxu0 0.0
  %560 = vmatpush1.msra.mxu0 0.0
  %561 = vmatprep.subr.mxu0 0.0
  %562 = vmatpush1.msra.mxu0 0.0
  %563 = vmatprep.subr.mxu0 0.0
  %564 = vmatpush1.msra.mxu0 0.0
  %565 = vmatprep.mubr.f32.mxu0 0.0
  %566 = vmatmul.mubr.f32.gmra.mrb[0].mxu0 %v357
  %v567 = vpop.f32.mrb[0].mxu0
  %v568 = vadd.f32 %v483, %v567
  %v569 = vpop.f32.mrb[0].mxu0
  %570 = vmatprep.mubr.f32.mxu0 0.0
  %571 = vmatmul.mubr.f32.gmra.mrb[0].mxu0 %v358
  %v572 = vpop.f32.mrb[0].mxu0
  %v573 = vadd.f32 %v488, %v572
  %v574 = vpop.f32.mrb[0].mxu0
  %575 = vmatprep.mubr.f32.mxu0 0.0
  %576 = vmatmul.mubr.f32.gmra.mrb[0].mxu0 %v359
  %v577 = vpop.f32.mrb[0].mxu0
  %v578 = vadd.f32 %v493, %v577
  %v579 = vpop.f32.mrb[0].mxu0
  %580 = vmatprep.mubr.f32.mxu0 0.0
  %581 = vmatmul.mubr.f32.gmra.mrb[0].mxu0 %v360
  %v582 = vpop.f32.mrb[0].mxu0
  %v583 = vadd.f32 %v498, %v582
  %v584 = vpop.f32.mrb[0].mxu0
  %585 = vdwg.mxu0
  %v586 = vadd.f32 %v79, %v568
  %v587 = vadd.f32 %v80, %v573
  %v588 = vadd.f32 %v81, %v578
  %v589 = vadd.f32 %v82, %v583
  %v590 = vmax.f32 %v586, 0.0
  %v591 = vmax.f32 %v587, 0.0
  %v592 = vmax.f32 %v588, 0.0
  %v593 = vmax.f32 %v589, 0.0
  %v594 = vrot.slane %v590, 7
  %v595 = vrot.slane %v591, 7
  %v596 = vrot.slane %v592, 7
  %v597 = vrot.slane %v593, 7
  %v598 = vsel %vm87, %v596, %v597
  %v599 = vsel %vm87, %v595, %v596
  %v600 = vsel %vm87, %v594, %v595
  %v601 = vsel %vm87, %v597, %v594
  %v602 = vsel %vm67, %v601, 0.0
  %v603 = vsel %vm68, %v600, 0.0
  %v604 = vsel %vm69, %v599, 0.0
  %v605 = vsel %vm70, %v598, 0.0
  %v606 = vrot.slane %v590, 1
  %v607 = vrot.slane %v591, 1
  %v608 = vrot.slane %v592, 1
  %v609 = vrot.slane %v593, 1
  %v610 = vsel %vm100, %v608, %v609
  %v611 = vsel %vm100, %v607, %v608
  %v612 = vsel %vm100, %v606, %v607
  %v613 = vsel %vm100, %v609, %v606
  %v614 = vsel %vm71, %v612, 0.0
  %v615 = vsel %vm72, %v611, 0.0
  %v616 = vsel %vm73, %v610, 0.0
  %v617 = vsel %vm74, %v613, 0.0
  %s618 = scalar_lea.vmem %s1, 768
  %v619 = vld [vmem:[%s618] sm:$0xff]
  %v620 = vld [vmem:[%s618 + $0x8] sm:$0xff]
  %v621 = vld [vmem:[%s618 + $0x10] sm:$0xff]
  %v622 = vld [vmem:[%s618 + $0x18] sm:$0xff]
  %v623 = vld [vmem:[%s618 + $0x20] sm:$0xff]
  %v624 = vld [vmem:[%s618 + $0x28] sm:$0xff]
  %v625 = vld [vmem:[%s618 + $0x30] sm:$0xff]
  %v626 = vld [vmem:[%s618 + $0x38] sm:$0xff]
  %v627 = vld [vmem:[%s618 + $0x40] sm:$0xff]
  %v628 = vld [vmem:[%s618 + $0x48] sm:$0xff]
  %v629 = vld [vmem:[%s618 + $0x50] sm:$0xff]
  %v630 = vld [vmem:[%s618 + $0x58] sm:$0xff]
  %v631 = vld [vmem:[%s618 + $0x60] sm:$0xff]
  %v632 = vld [vmem:[%s618 + $0x68] sm:$0xff]
  %v633 = vld [vmem:[%s618 + $0x70] sm:$0xff]
  %v634 = vld [vmem:[%s618 + $0x78] sm:$0xff]
  %v635 = vld [vmem:[%s618 + $0x80] sm:$0xff]
  %v636 = vld [vmem:[%s618 + $0x88] sm:$0xff]
  %v637 = vld [vmem:[%s618 + $0x90] sm:$0xff]
  %v638 = vld [vmem:[%s618 + $0x98] sm:$0xff]
  %v639 = vld [vmem:[%s618 + $0xa0] sm:$0xff]
  %v640 = vld [vmem:[%s618 + $0xa8] sm:$0xff]
  %v641 = vld [vmem:[%s618 + $0xb0] sm:$0xff]
  %v642 = vld [vmem:[%s618 + $0xb8] sm:$0xff]
  %v643 = vld [vmem:[%s618 + $0xc0] sm:$0xff]
  %v644 = vld [vmem:[%s618 + $0xc8] sm:$0xff]
  %v645 = vld [vmem:[%s618 + $0xd0] sm:$0xff]
  %v646 = vld [vmem:[%s618 + $0xd8] sm:$0xff]
  %v647 = vld [vmem:[%s618 + $0xe0] sm:$0xff]
  %v648 = vld [vmem:[%s618 + $0xe8] sm:$0xff]
  %v649 = vld [vmem:[%s618 + $0xf0] sm:$0xff]
  %v650 = vld [vmem:[%s618 + $0xf8] sm:$0xff]
  %v651 = vld [vmem:[%s618 + $0x100] sm:$0xff]
  %v652 = vld [vmem:[%s618 + $0x108] sm:$0xff]
  %v653 = vld [vmem:[%s618 + $0x110] sm:$0xff]
  %v654 = vld [vmem:[%s618 + $0x118] sm:$0xff]
  %v655 = vld [vmem:[%s618 + $0x120] sm:$0xff]
  %v656 = vld [vmem:[%s618 + $0x128] sm:$0xff]
  %v657 = vld [vmem:[%s618 + $0x130] sm:$0xff]
  %v658 = vld [vmem:[%s618 + $0x138] sm:$0xff]
  %v659 = vld [vmem:[%s618 + $0x140] sm:$0xff]
  %v660 = vld [vmem:[%s618 + $0x148] sm:$0xff]
  %v661 = vld [vmem:[%s618 + $0x150] sm:$0xff]
  %v662 = vld [vmem:[%s618 + $0x158] sm:$0xff]
  %v663 = vld [vmem:[%s618 + $0x160] sm:$0xff]
  %v664 = vld [vmem:[%s618 + $0x168] sm:$0xff]
  %v665 = vld [vmem:[%s618 + $0x170] sm:$0xff]
  %v666 = vld [vmem:[%s618 + $0x178] sm:$0xff]
  %v668 = vlaneseq
  %v669 = vshrl.u32 %v668, 7
  %v670 = vsub.s32 0, %v669
  %v671 = vrot.slane %v77, %v670
  %673 = vmatprep.subr.mxu0 0.0
  %674 = vmatpush1.msra.mxu0 %v619
  %675 = vmatprep.subr.mxu0 0.0
  %676 = vmatpush1.msra.mxu0 %v620
  %677 = vmatprep.subr.mxu0 0.0
  %678 = vmatpush1.msra.mxu0 %v621
  %679 = vmatprep.subr.mxu0 0.0
  %680 = vmatpush1.msra.mxu0 %v622
  %681 = vmatprep.subr.mxu0 0.0
  %682 = vmatpush1.msra.mxu0 %v623
  %683 = vmatprep.subr.mxu0 0.0
  %684 = vmatpush1.msra.mxu0 %v624
  %685 = vmatprep.subr.mxu0 0.0
  %686 = vmatpush1.msra.mxu0 %v625
  %687 = vmatprep.subr.mxu0 0.0
  %688 = vmatpush1.msra.mxu0 %v626
  %689 = vmatprep.subr.mxu0 0.0
  %690 = vmatpush1.msra.mxu0 %v627
  %691 = vmatprep.subr.mxu0 0.0
  %692 = vmatpush1.msra.mxu0 %v628
  %693 = vmatprep.subr.mxu0 0.0
  %694 = vmatpush1.msra.mxu0 %v629
  %695 = vmatprep.subr.mxu0 0.0
  %696 = vmatpush1.msra.mxu0 %v630
  %697 = vmatprep.subr.mxu0 0.0
  %698 = vmatpush1.msra.mxu0 %v631
  %699 = vmatprep.subr.mxu0 0.0
  %700 = vmatpush1.msra.mxu0 %v632
  %701 = vmatprep.subr.mxu0 0.0
  %702 = vmatpush1.msra.mxu0 %v633
  %703 = vmatprep.subr.mxu0 0.0
  %704 = vmatpush1.msra.mxu0 %v634
  %705 = vmatprep.subr.mxu0 0.0
  %706 = vmatpush1.msra.mxu0 %v635
  %707 = vmatprep.subr.mxu0 0.0
  %708 = vmatpush1.msra.mxu0 %v636
  %709 = vmatprep.subr.mxu0 0.0
  %710 = vmatpush1.msra.mxu0 %v637
  %711 = vmatprep.subr.mxu0 0.0
  %712 = vmatpush1.msra.mxu0 %v638
  %713 = vmatprep.subr.mxu0 0.0
  %714 = vmatpush1.msra.mxu0 %v639
  %715 = vmatprep.subr.mxu0 0.0
  %716 = vmatpush1.msra.mxu0 %v640
  %717 = vmatprep.subr.mxu0 0.0
  %718 = vmatpush1.msra.mxu0 %v641
  %719 = vmatprep.subr.mxu0 0.0
  %720 = vmatpush1.msra.mxu0 %v642
  %721 = vmatprep.subr.mxu0 0.0
  %722 = vmatpush1.msra.mxu0 %v643
  %723 = vmatprep.subr.mxu0 0.0
  %724 = vmatpush1.msra.mxu0 %v644
  %725 = vmatprep.subr.mxu0 0.0
  %726 = vmatpush1.msra.mxu0 %v645
  %727 = vmatprep.subr.mxu0 0.0
  %728 = vmatpush1.msra.mxu0 %v646
  %729 = vmatprep.subr.mxu0 0.0
  %730 = vmatpush1.msra.mxu0 %v647
  %731 = vmatprep.subr.mxu0 0.0
  %732 = vmatpush1.msra.mxu0 %v648
  %733 = vmatprep.subr.mxu0 0.0
  %734 = vmatpush1.msra.mxu0 %v649
  %735 = vmatprep.subr.mxu0 0.0
  %736 = vmatpush1.msra.mxu0 %v650
  %737 = vmatprep.mubr.f32.mxu0 %v590
  %738 = vmatmul.mubr.f32.gmra.mrb[0].mxu0 %v602
  %v739 = vpop.f32.mrb[0].mxu0
  %v740 = vadd.f32 %v671, %v739
  %v741 = vpop.f32.mrb[0].mxu0
  %742 = vmatprep.mubr.f32.mxu0 %v591
  %743 = vmatmul.mubr.f32.gmra.mrb[0].mxu0 %v603
  %v744 = vpop.f32.mrb[0].mxu0
  %v745 = vadd.f32 %v671, %v744
  %v746 = vpop.f32.mrb[0].mxu0
  %747 = vmatprep.mubr.f32.mxu0 %v592
  %748 = vmatmul.mubr.f32.gmra.mrb[0].mxu0 %v604
  %v749 = vpop.f32.mrb[0].mxu0
  %v750 = vadd.f32 %v671, %v749
  %v751 = vpop.f32.mrb[0].mxu0
  %752 = vmatprep.mubr.f32.mxu0 %v593
  %753 = vmatmul.mubr.f32.gmra.mrb[0].mxu0 %v605
  %v754 = vpop.f32.mrb[0].mxu0
  %v755 = vadd.f32 %v671, %v754
  %v756 = vpop.f32.mrb[0].mxu0
  %757 = vdwg.mxu0
  %758 = vmatprep.subr.mxu0 0.0
  %759 = vmatpush1.msra.mxu0 %v651
  %760 = vmatprep.subr.mxu0 0.0
  %761 = vmatpush1.msra.mxu0 %v652
  %762 = vmatprep.subr.mxu0 0.0
  %763 = vmatpush1.msra.mxu0 %v653
  %764 = vmatprep.subr.mxu0 0.0
  %765 = vmatpush1.msra.mxu0 %v654
  %766 = vmatprep.subr.mxu0 0.0
  %767 = vmatpush1.msra.mxu0 %v655
  %768 = vmatprep.subr.mxu0 0.0
  %769 = vmatpush1.msra.mxu0 %v656
  %770 = vmatprep.subr.mxu0 0.0
  %771 = vmatpush1.msra.mxu0 %v657
  %772 = vmatprep.subr.mxu0 0.0
  %773 = vmatpush1.msra.mxu0 %v658
  %774 = vmatprep.subr.mxu0 0.0
  %775 = vmatpush1.msra.mxu0 %v659
  %776 = vmatprep.subr.mxu0 0.0
  %777 = vmatpush1.msra.mxu0 %v660
  %778 = vmatprep.subr.mxu0 0.0
  %779 = vmatpush1.msra.mxu0 %v661
  %780 = vmatprep.subr.mxu0 0.0
  %781 = vmatpush1.msra.mxu0 %v662
  %782 = vmatprep.subr.mxu0 0.0
  %783 = vmatpush1.msra.mxu0 %v663
  %784 = vmatprep.subr.mxu0 0.0
  %785 = vmatpush1.msra.mxu0 %v664
  %786 = vmatprep.subr.mxu0 0.0
  %787 = vmatpush1.msra.mxu0 %v665
  %788 = vmatprep.subr.mxu0 0.0
  %789 = vmatpush1.msra.mxu0 %v666
  %790 = vmatprep.subr.mxu0 0.0
  %791 = vmatpush1.msra.mxu0 0.0
  %792 = vmatprep.subr.mxu0 0.0
  %793 = vmatpush1.msra.mxu0 0.0
  %794 = vmatprep.subr.mxu0 0.0
  %795 = vmatpush1.msra.mxu0 0.0
  %796 = vmatprep.subr.mxu0 0.0
  %797 = vmatpush1.msra.mxu0 0.0
  %798 = vmatprep.subr.mxu0 0.0
  %799 = vmatpush1.msra.mxu0 0.0
  %800 = vmatprep.subr.mxu0 0.0
  %801 = vmatpush1.msra.mxu0 0.0
  %802 = vmatprep.subr.mxu0 0.0
  %803 = vmatpush1.msra.mxu0 0.0
  %804 = vmatprep.subr.mxu0 0.0
  %805 = vmatpush1.msra.mxu0 0.0
  %806 = vmatprep.subr.mxu0 0.0
  %807 = vmatpush1.msra.mxu0 0.0
  %808 = vmatprep.subr.mxu0 0.0
  %809 = vmatpush1.msra.mxu0 0.0
  %810 = vmatprep.subr.mxu0 0.0
  %811 = vmatpush1.msra.mxu0 0.0
  %812 = vmatprep.subr.mxu0 0.0
  %813 = vmatpush1.msra.mxu0 0.0
  %814 = vmatprep.subr.mxu0 0.0
  %815 = vmatpush1.msra.mxu0 0.0
  %816 = vmatprep.subr.mxu0 0.0
  %817 = vmatpush1.msra.mxu0 0.0
  %818 = vmatprep.subr.mxu0 0.0
  %819 = vmatpush1.msra.mxu0 0.0
  %820 = vmatprep.subr.mxu0 0.0
  %821 = vmatpush1.msra.mxu0 0.0
  %822 = vmatprep.mubr.f32.mxu0 0.0
  %823 = vmatmul.mubr.f32.gmra.mrb[0].mxu0 %v614
  %v824 = vpop.f32.mrb[0].mxu0
  %v825 = vadd.f32 %v740, %v824
  %v826 = vpop.f32.mrb[0].mxu0
  %827 = vmatprep.mubr.f32.mxu0 0.0
  %828 = vmatmul.mubr.f32.gmra.mrb[0].mxu0 %v615
  %v829 = vpop.f32.mrb[0].mxu0
  %v830 = vadd.f32 %v745, %v829
  %v831 = vpop.f32.mrb[0].mxu0
  %832 = vmatprep.mubr.f32.mxu0 0.0
  %833 = vmatmul.mubr.f32.gmra.mrb[0].mxu0 %v616
  %v834 = vpop.f32.mrb[0].mxu0
  %v835 = vadd.f32 %v750, %v834
  %v836 = vpop.f32.mrb[0].mxu0
  %837 = vmatprep.mubr.f32.mxu0 0.0
  %838 = vmatmul.mubr.f32.gmra.mrb[0].mxu0 %v617
  %v839 = vpop.f32.mrb[0].mxu0
  %v840 = vadd.f32 %v755, %v839
  %v841 = vpop.f32.mrb[0].mxu0
  %842 = vdwg.mxu0
  %v843 = vmax.f32 %v825, 0.0
  %v844 = vmax.f32 %v830, 0.0
  %v845 = vmax.f32 %v835, 0.0
  %v846 = vmax.f32 %v840, 0.0
  %v847 = vrot.slane %v843, 7
  %v848 = vrot.slane %v844, 7
  %v849 = vrot.slane %v845, 7
  %v850 = vrot.slane %v846, 7
  %v851 = vsel %vm87, %v849, %v850
  %v852 = vsel %vm87, %v848, %v849
  %v853 = vsel %vm87, %v847, %v848
  %v854 = vsel %vm87, %v850, %v847
  %v855 = vsel %vm67, %v854, 0.0
  %v856 = vsel %vm68, %v853, 0.0
  %v857 = vsel %vm69, %v852, 0.0
  %v858 = vsel %vm70, %v851, 0.0
  %v859 = vrot.slane %v843, 1
  %v860 = vrot.slane %v844, 1
  %v861 = vrot.slane %v845, 1
  %v862 = vrot.slane %v846, 1
  %v863 = vsel %vm100, %v861, %v862
  %v864 = vsel %vm100, %v860, %v861
  %v865 = vsel %vm100, %v859, %v860
  %v866 = vsel %vm100, %v862, %v859
  %v867 = vsel %vm71, %v865, 0.0
  %v868 = vsel %vm72, %v864, 0.0
  %v869 = vsel %vm73, %v863, 0.0
  %v870 = vsel %vm74, %v866, 0.0
  %s871 = scalar_lea.vmem %s1, 1152
  %v872 = vld [vmem:[%s871] sm:$0xff]
  %v873 = vld [vmem:[%s871 + $0x8] sm:$0xff]
  %v874 = vld [vmem:[%s871 + $0x10] sm:$0xff]
  %v875 = vld [vmem:[%s871 + $0x18] sm:$0xff]
  %v876 = vld [vmem:[%s871 + $0x20] sm:$0xff]
  %v877 = vld [vmem:[%s871 + $0x28] sm:$0xff]
  %v878 = vld [vmem:[%s871 + $0x30] sm:$0xff]
  %v879 = vld [vmem:[%s871 + $0x38] sm:$0xff]
  %v880 = vld [vmem:[%s871 + $0x40] sm:$0xff]
  %v881 = vld [vmem:[%s871 + $0x48] sm:$0xff]
  %v882 = vld [vmem:[%s871 + $0x50] sm:$0xff]
  %v883 = vld [vmem:[%s871 + $0x58] sm:$0xff]
  %v884 = vld [vmem:[%s871 + $0x60] sm:$0xff]
  %v885 = vld [vmem:[%s871 + $0x68] sm:$0xff]
  %v886 = vld [vmem:[%s871 + $0x70] sm:$0xff]
  %v887 = vld [vmem:[%s871 + $0x78] sm:$0xff]
  %v888 = vld [vmem:[%s871 + $0x80] sm:$0xff]
  %v889 = vld [vmem:[%s871 + $0x88] sm:$0xff]
  %v890 = vld [vmem:[%s871 + $0x90] sm:$0xff]
  %v891 = vld [vmem:[%s871 + $0x98] sm:$0xff]
  %v892 = vld [vmem:[%s871 + $0xa0] sm:$0xff]
  %v893 = vld [vmem:[%s871 + $0xa8] sm:$0xff]
  %v894 = vld [vmem:[%s871 + $0xb0] sm:$0xff]
  %v895 = vld [vmem:[%s871 + $0xb8] sm:$0xff]
  %v896 = vld [vmem:[%s871 + $0xc0] sm:$0xff]
  %v897 = vld [vmem:[%s871 + $0xc8] sm:$0xff]
  %v898 = vld [vmem:[%s871 + $0xd0] sm:$0xff]
  %v899 = vld [vmem:[%s871 + $0xd8] sm:$0xff]
  %v900 = vld [vmem:[%s871 + $0xe0] sm:$0xff]
  %v901 = vld [vmem:[%s871 + $0xe8] sm:$0xff]
  %v902 = vld [vmem:[%s871 + $0xf0] sm:$0xff]
  %v903 = vld [vmem:[%s871 + $0xf8] sm:$0xff]
  %v904 = vld [vmem:[%s871 + $0x100] sm:$0xff]
  %v905 = vld [vmem:[%s871 + $0x108] sm:$0xff]
  %v906 = vld [vmem:[%s871 + $0x110] sm:$0xff]
  %v907 = vld [vmem:[%s871 + $0x118] sm:$0xff]
  %v908 = vld [vmem:[%s871 + $0x120] sm:$0xff]
  %v909 = vld [vmem:[%s871 + $0x128] sm:$0xff]
  %v910 = vld [vmem:[%s871 + $0x130] sm:$0xff]
  %v911 = vld [vmem:[%s871 + $0x138] sm:$0xff]
  %v912 = vld [vmem:[%s871 + $0x140] sm:$0xff]
  %v913 = vld [vmem:[%s871 + $0x148] sm:$0xff]
  %v914 = vld [vmem:[%s871 + $0x150] sm:$0xff]
  %v915 = vld [vmem:[%s871 + $0x158] sm:$0xff]
  %v916 = vld [vmem:[%s871 + $0x160] sm:$0xff]
  %v917 = vld [vmem:[%s871 + $0x168] sm:$0xff]
  %v918 = vld [vmem:[%s871 + $0x170] sm:$0xff]
  %v919 = vld [vmem:[%s871 + $0x178] sm:$0xff]
  %v921 = vlaneseq
  %v922 = vshrl.u32 %v921, 7
  %v923 = vsub.s32 0, %v922
  %v924 = vrot.slane %v78, %v923
  %926 = vmatprep.subr.mxu0 0.0
  %927 = vmatpush1.msra.mxu0 %v872
  %928 = vmatprep.subr.mxu0 0.0
  %929 = vmatpush1.msra.mxu0 %v873
  %930 = vmatprep.subr.mxu0 0.0
  %931 = vmatpush1.msra.mxu0 %v874
  %932 = vmatprep.subr.mxu0 0.0
  %933 = vmatpush1.msra.mxu0 %v875
  %934 = vmatprep.subr.mxu0 0.0
  %935 = vmatpush1.msra.mxu0 %v876
  %936 = vmatprep.subr.mxu0 0.0
  %937 = vmatpush1.msra.mxu0 %v877
  %938 = vmatprep.subr.mxu0 0.0
  %939 = vmatpush1.msra.mxu0 %v878
  %940 = vmatprep.subr.mxu0 0.0
  %941 = vmatpush1.msra.mxu0 %v879
  %942 = vmatprep.subr.mxu0 0.0
  %943 = vmatpush1.msra.mxu0 %v880
  %944 = vmatprep.subr.mxu0 0.0
  %945 = vmatpush1.msra.mxu0 %v881
  %946 = vmatprep.subr.mxu0 0.0
  %947 = vmatpush1.msra.mxu0 %v882
  %948 = vmatprep.subr.mxu0 0.0
  %949 = vmatpush1.msra.mxu0 %v883
  %950 = vmatprep.subr.mxu0 0.0
  %951 = vmatpush1.msra.mxu0 %v884
  %952 = vmatprep.subr.mxu0 0.0
  %953 = vmatpush1.msra.mxu0 %v885
  %954 = vmatprep.subr.mxu0 0.0
  %955 = vmatpush1.msra.mxu0 %v886
  %956 = vmatprep.subr.mxu0 0.0
  %957 = vmatpush1.msra.mxu0 %v887
  %958 = vmatprep.subr.mxu0 0.0
  %959 = vmatpush1.msra.mxu0 %v888
  %960 = vmatprep.subr.mxu0 0.0
  %961 = vmatpush1.msra.mxu0 %v889
  %962 = vmatprep.subr.mxu0 0.0
  %963 = vmatpush1.msra.mxu0 %v890
  %964 = vmatprep.subr.mxu0 0.0
  %965 = vmatpush1.msra.mxu0 %v891
  %966 = vmatprep.subr.mxu0 0.0
  %967 = vmatpush1.msra.mxu0 %v892
  %968 = vmatprep.subr.mxu0 0.0
  %969 = vmatpush1.msra.mxu0 %v893
  %970 = vmatprep.subr.mxu0 0.0
  %971 = vmatpush1.msra.mxu0 %v894
  %972 = vmatprep.subr.mxu0 0.0
  %973 = vmatpush1.msra.mxu0 %v895
  %974 = vmatprep.subr.mxu0 0.0
  %975 = vmatpush1.msra.mxu0 %v896
  %976 = vmatprep.subr.mxu0 0.0
  %977 = vmatpush1.msra.mxu0 %v897
  %978 = vmatprep.subr.mxu0 0.0
  %979 = vmatpush1.msra.mxu0 %v898
  %980 = vmatprep.subr.mxu0 0.0
  %981 = vmatpush1.msra.mxu0 %v899
  %982 = vmatprep.subr.mxu0 0.0
  %983 = vmatpush1.msra.mxu0 %v900
  %984 = vmatprep.subr.mxu0 0.0
  %985 = vmatpush1.msra.mxu0 %v901
  %986 = vmatprep.subr.mxu0 0.0
  %987 = vmatpush1.msra.mxu0 %v902
  %988 = vmatprep.subr.mxu0 0.0
  %989 = vmatpush1.msra.mxu0 %v903
  %990 = vmatprep.mubr.f32.mxu0 %v843
  %991 = vmatmul.mubr.f32.gmra.mrb[0].mxu0 %v855
  %v992 = vpop.f32.mrb[0].mxu0
  %v993 = vadd.f32 %v924, %v992
  %v994 = vpop.f32.mrb[0].mxu0
  %995 = vmatprep.mubr.f32.mxu0 %v844
  %996 = vmatmul.mubr.f32.gmra.mrb[0].mxu0 %v856
  %v997 = vpop.f32.mrb[0].mxu0
  %v998 = vadd.f32 %v924, %v997
  %v999 = vpop.f32.mrb[0].mxu0
  %1000 = vmatprep.mubr.f32.mxu0 %v845
  %1001 = vmatmul.mubr.f32.gmra.mrb[0].mxu0 %v857
  %v1002 = vpop.f32.mrb[0].mxu0
  %v1003 = vadd.f32 %v924, %v1002
  %v1004 = vpop.f32.mrb[0].mxu0
  %1005 = vmatprep.mubr.f32.mxu0 %v846
  %1006 = vmatmul.mubr.f32.gmra.mrb[0].mxu0 %v858
  %v1007 = vpop.f32.mrb[0].mxu0
  %v1008 = vadd.f32 %v924, %v1007
  %v1009 = vpop.f32.mrb[0].mxu0
  %1010 = vdwg.mxu0
  %1011 = vmatprep.subr.mxu0 0.0
  %1012 = vmatpush1.msra.mxu0 %v904
  %1013 = vmatprep.subr.mxu0 0.0
  %1014 = vmatpush1.msra.mxu0 %v905
  %1015 = vmatprep.subr.mxu0 0.0
  %1016 = vmatpush1.msra.mxu0 %v906
  %1017 = vmatprep.subr.mxu0 0.0
  %1018 = vmatpush1.msra.mxu0 %v907
  %1019 = vmatprep.subr.mxu0 0.0
  %1020 = vmatpush1.msra.mxu0 %v908
  %1021 = vmatprep.subr.mxu0 0.0
  %1022 = vmatpush1.msra.mxu0 %v909
  %1023 = vmatprep.subr.mxu0 0.0
  %1024 = vmatpush1.msra.mxu0 %v910
  %1025 = vmatprep.subr.mxu0 0.0
  %1026 = vmatpush1.msra.mxu0 %v911
  %1027 = vmatprep.subr.mxu0 0.0
  %1028 = vmatpush1.msra.mxu0 %v912
  %1029 = vmatprep.subr.mxu0 0.0
  %1030 = vmatpush1.msra.mxu0 %v913
  %1031 = vmatprep.subr.mxu0 0.0
  %1032 = vmatpush1.msra.mxu0 %v914
  %1033 = vmatprep.subr.mxu0 0.0
  %1034 = vmatpush1.msra.mxu0 %v915
  %1035 = vmatprep.subr.mxu0 0.0
  %1036 = vmatpush1.msra.mxu0 %v916
  %1037 = vmatprep.subr.mxu0 0.0
  %1038 = vmatpush1.msra.mxu0 %v917
  %1039 = vmatprep.subr.mxu0 0.0
  %1040 = vmatpush1.msra.mxu0 %v918
  %1041 = vmatprep.subr.mxu0 0.0
  %1042 = vmatpush1.msra.mxu0 %v919
  %1043 = vmatprep.subr.mxu0 0.0
  %1044 = vmatpush1.msra.mxu0 0.0
  %1045 = vmatprep.subr.mxu0 0.0
  %1046 = vmatpush1.msra.mxu0 0.0
  %1047 = vmatprep.subr.mxu0 0.0
  %1048 = vmatpush1.msra.mxu0 0.0
  %1049 = vmatprep.subr.mxu0 0.0
  %1050 = vmatpush1.msra.mxu0 0.0
  %1051 = vmatprep.subr.mxu0 0.0
  %1052 = vmatpush1.msra.mxu0 0.0
  %1053 = vmatprep.subr.mxu0 0.0
  %1054 = vmatpush1.msra.mxu0 0.0
  %1055 = vmatprep.subr.mxu0 0.0
  %1056 = vmatpush1.msra.mxu0 0.0
  %1057 = vmatprep.subr.mxu0 0.0
  %1058 = vmatpush1.msra.mxu0 0.0
  %1059 = vmatprep.subr.mxu0 0.0
  %1060 = vmatpush1.msra.mxu0 0.0
  %1061 = vmatprep.subr.mxu0 0.0
  %1062 = vmatpush1.msra.mxu0 0.0
  %1063 = vmatprep.subr.mxu0 0.0
  %1064 = vmatpush1.msra.mxu0 0.0
  %1065 = vmatprep.subr.mxu0 0.0
  %1066 = vmatpush1.msra.mxu0 0.0
  %1067 = vmatprep.subr.mxu0 0.0
  %1068 = vmatpush1.msra.mxu0 0.0
  %1069 = vmatprep.subr.mxu0 0.0
  %1070 = vmatpush1.msra.mxu0 0.0
  %1071 = vmatprep.subr.mxu0 0.0
  %1072 = vmatpush1.msra.mxu0 0.0
  %1073 = vmatprep.subr.mxu0 0.0
  %1074 = vmatpush1.msra.mxu0 0.0
  %1075 = vmatprep.mubr.f32.mxu0 0.0
  %1076 = vmatmul.mubr.f32.gmra.mrb[0].mxu0 %v867
  %v1077 = vpop.f32.mrb[0].mxu0
  %v1078 = vadd.f32 %v993, %v1077
  %v1079 = vpop.f32.mrb[0].mxu0
  %1080 = vmatprep.mubr.f32.mxu0 0.0
  %1081 = vmatmul.mubr.f32.gmra.mrb[0].mxu0 %v868
  %v1082 = vpop.f32.mrb[0].mxu0
  %v1083 = vadd.f32 %v998, %v1082
  %v1084 = vpop.f32.mrb[0].mxu0
  %1085 = vmatprep.mubr.f32.mxu0 0.0
  %1086 = vmatmul.mubr.f32.gmra.mrb[0].mxu0 %v869
  %v1087 = vpop.f32.mrb[0].mxu0
  %v1088 = vadd.f32 %v1003, %v1087
  %v1089 = vpop.f32.mrb[0].mxu0
  %1090 = vmatprep.mubr.f32.mxu0 0.0
  %1091 = vmatmul.mubr.f32.gmra.mrb[0].mxu0 %v870
  %v1092 = vpop.f32.mrb[0].mxu0
  %v1093 = vadd.f32 %v1008, %v1092
  %v1094 = vpop.f32.mrb[0].mxu0
  %1095 = vdwg.mxu0
  %v1096 = vadd.f32 %v590, %v1078
  %v1097 = vadd.f32 %v591, %v1083
  %v1098 = vadd.f32 %v592, %v1088
  %v1099 = vadd.f32 %v593, %v1093
  %v1100 = vmax.f32 %v1096, 0.0
  %v1101 = vmax.f32 %v1097, 0.0
  %v1102 = vmax.f32 %v1098, 0.0
  %v1103 = vmax.f32 %v1099, 0.0
  %1104 = vst [vmem:[%s3] sm:$0xff] %v1100
  %1105 = vst [vmem:[%s3 + $0x8] sm:$0xff] %v1101
  %1106 = vst [vmem:[%s3 + $0x10] sm:$0xff] %v1102
  %1107 = vst [vmem:[%s3 + $0x18] sm:$0xff] %v1103
  // Predicated region
  $region14: #{residual_layer_forward.1} parent=0 // pred_check
    _
  $region15: #{residual_layer_forward.1} parent=0 // pred_check_branch
    %1109 = sbr.rel (0) target = $region17
  $region16: #{residual_layer_forward.1} parent=0 // pred_region
    _
  $region17: #{residual_layer_forward.1} parent=0 // pred_fallthru
    _
  // Predicated region
  $region18: #{residual_layer_forward.1} parent=0 // pred_check
    _
  $region19: #{residual_layer_forward.1} parent=0 // pred_check_branch
    %1111 = sbr.rel (0) target = $region21
  $region20: #{residual_layer_forward.1} parent=0 // pred_region
    _
  $region21: #{residual_layer_forward.1} parent=0 // pred_fallthru
    _

</llo_original>
